<compile_context>
chip_gen: v7x
topology: tpu7x:2x2x1
jax: 0.10.0
libtpu: 0.0.40
codegen_flags: <defaults>
</compile_context>

<pallas_src>
import numpy as np
import jax
import jax.numpy as jnp
from jax import lax
from jax.experimental import pallas as pl
from jax.experimental.pallas import tpu as pltpu

_LN_EPS = 1e-5
_MXU_DTYPE = jnp.bfloat16   # MXU operand dtype (accumulation stays f32)


def relpos_mha_pallas(q, k, v, pos_emb, params, x_len, *, q_tile=256):
    (wq3, wk3, wv3, wp3, pbu, pbv, wfc3, gq, bq, gk, bk, gv, bv) = params
    H, D, dk = wq3.shape
    _, T, _ = q.shape
    P = pos_emb.shape[1]
    HK = H * dk
    assert x_len == T, "rel-shift implementation assumes x_len == q/k length"
    assert P >= x_len

    # ---- head-fused ("wide") weight layouts (wrapper-side, cheap XLA reshapes) ----
    to_wide = lambda w3: jnp.transpose(w3, (1, 0, 2)).reshape(D, HK)   # (D, H*dk)
    wq_w = to_wide(wq3)
    wk_w = to_wide(wk3)
    wv_w = to_wide(wv3)
    wp_w = to_wide(wp3)
    wfc_w = wfc3.reshape(HK, D)                                        # (H*dk, D)
    pbu_v = pbu.reshape(1, HK)
    pbv_v = pbv.reshape(1, HK)

    # ---- query-row tiling; the grid axis is fully parallel (no cross-step state) ----
    TQ = T
    for cand in (q_tile, 128):
        if T > cand and T % cand == 0 and cand % 8 == 0:
            TQ = cand
            break
    nT = T // TQ

    W = 2 * (P + 1)                        # width of the per-row rel-shift strip
    nbits = max(1, (T - 1).bit_length())   # barrel-shifter stages (max rotation T-1)

    def kernel(q_ref, k_ref, v_ref, pos_ref,
               wq_ref, wk_ref, wv_ref, wp_ref, wfc_ref,
               pbu_ref, pbv_ref,
               gq_ref, bq_ref, gk_ref, bk_ref, gv_ref, bv_ref,
               out_ref):
        f32 = jnp.float32
        mx = lambda x: x.astype(_MXU_DTYPE)

        i0 = pl.program_id(0)
        start = pl.multiple_of(i0 * TQ, TQ)

        def layer_norm(x, g, b):
            mu = jnp.mean(x, axis=-1, keepdims=True)
            var = jnp.mean(jnp.square(x - mu), axis=-1, keepdims=True)
            return (x - mu) * lax.rsqrt(var + _LN_EPS) * g + b

        g_q, b_q = gq_ref[...], bq_ref[...]

        # residual / query tile
        q_tile_raw = q_ref[0, pl.ds(start, TQ), :]                        # (TQ, D)
        qn = layer_norm(q_tile_raw, g_q, b_q)
        # LayerNorm of k / v is head-independent: done once per tile (not per head).
        kn = layer_norm(k_ref[0, :, :], gk_ref[...], bk_ref[...])         # (T, D)
        vn = layer_norm(v_ref[0, :, :], gv_ref[...], bv_ref[...])         # (T, D)
        pos = pos_ref[0, :, :]                                            # (P, D)

        # One extra query row (first row of the next tile): its bd row is the
        # "next row" source that _rel_shift needs for this tile's last row.  For the
        # last tile that value is provably never read, so clamp to a valid, aligned
        # row instead of reading out of bounds.
        nrow = pl.multiple_of(jnp.minimum(start + TQ, T - TQ), 8)
        qn_next = layer_norm(q_ref[0, pl.ds(nrow, 1), :], g_q, b_q)       # (1, D)

        # ---- head-fused projections: one wide MXU matmul each (bf16 in, f32 acc) ----
        wq_b = mx(wq_ref[...])
        qh = jnp.dot(mx(qn), wq_b, preferred_element_type=f32)             # (TQ, HK)
        qh_next = jnp.dot(mx(qn_next), wq_b, preferred_element_type=f32)   # (1, HK)
        kh = jnp.dot(mx(kn), mx(wk_ref[...]), preferred_element_type=f32)  # (T, HK)
        vh = jnp.dot(mx(vn), mx(wv_ref[...]), preferred_element_type=f32)  # (T, HK)
        ph = jnp.dot(mx(pos), mx(wp_ref[...]), preferred_element_type=f32) # (P, HK)

        qu = qh + pbu_ref[...]                                             # (TQ, HK)
        qv_ext = jnp.concatenate([qh, qh_next], axis=0) + pbv_ref[...]     # (TQ+1, HK)

        # global query-row index per tile row (drives the rel-shift rotation masks)
        gidx = start + lax.broadcasted_iota(jnp.int32, (TQ, W), 0)

        dn = (((1,), (1,)), ((), ()))        # contract d_k of both operands
        o_parts = []
        for h in range(H):                   # static unroll; H is small
            sl = slice(h * dk, (h + 1) * dk)
            ac = lax.dot_general(mx(qu[:, sl]), mx(kh[:, sl]), dn,
                                 preferred_element_type=f32)               # (TQ, T)
            bd_ext = lax.dot_general(mx(qv_ext[:, sl]), mx(ph[:, sl]), dn,
                                     preferred_element_type=f32)           # (TQ+1, P)

            # ---- _rel_shift as a per-row rotation of a small strip:
            #   strip[r]      = [0, bd[r, :], 0, bd[r+1, :]]          (width 2P+2)
            #   shifted[r, j] = strip[r, x_len - global_row(r) + j]
            # Row-dependent rotation = log2(T)-stage barrel shifter of static lane
            # rolls (slice+concat) + iota-mask selects.
            # TODO(synk): collapse the ladder into a single strided XLU rotation
            # (pltpu.roll(strip, shift=start, axis=1, stride=1, stride_axis=0)) once
            # its stride semantics are pinned down on the deployment Mosaic version.
            zc = jnp.zeros((TQ + 1, 1), f32)
            padded = jnp.concatenate([zc, bd_ext], axis=1)                 # (TQ+1, P+1)
            strip = jnp.concatenate([padded[:TQ, :], padded[1:TQ + 1, :]],
                                    axis=1)                                # (TQ, 2P+2)
            for bbit in range(nbits):
                s = 1 << bbit
                rolled = jnp.concatenate([strip[:, W - s:], strip[:, :W - s]],
                                         axis=1)                           # right-rot s
                strip = jnp.where(((gidx >> bbit) & 1) == 1, rolled, strip)
            shifted = strip[:, T:T + x_len]                                # (TQ, x_len)

            scores = ac + shifted            # no 1/sqrt(d_k) scaling (matches module)
            m = jnp.max(scores, axis=-1, keepdims=True)
            e = jnp.exp(scores - m)
            inv = pl.reciprocal(jnp.sum(e, axis=-1, keepdims=True), approx=True)
            p_attn = e * inv
            o_parts.append(jnp.dot(mx(p_attn), mx(vh[:, sl]),
                                   preferred_element_type=f32))            # (TQ, dk)

        # head-fused output projection + residual; one lane-dense (D-wide) store
        o_all = jnp.concatenate(o_parts, axis=-1)                          # (TQ, HK)
        out = jnp.dot(mx(o_all), mx(wfc_ref[...]), preferred_element_type=f32)
        out_ref[0, :, :] = out + q_tile_raw

    c3 = lambda shp: pl.BlockSpec(shp, lambda i: (0, 0, 0))
    c2 = lambda shp: pl.BlockSpec(shp, lambda i: (0, 0))
    grid_spec = pltpu.PrefetchScalarGridSpec(
        num_scalar_prefetch=0,
        grid=(nT,),
        in_specs=[
            c3((1, T, D)), c3((1, T, D)), c3((1, T, D)), c3((1, P, D)),
            c2((D, HK)), c2((D, HK)), c2((D, HK)), c2((D, HK)), c2((HK, D)),
            c2((1, HK)), c2((1, HK)),
            c2((1, D)), c2((1, D)), c2((1, D)), c2((1, D)), c2((1, D)), c2((1, D)),
        ],
        out_specs=pl.BlockSpec((1, TQ, D), lambda i: (0, i, 0)),
    )
    return pl.pallas_call(
        kernel,
        out_shape=jax.ShapeDtypeStruct((1, T, D), jnp.float32),
        grid_spec=grid_spec,
        compiler_params=pltpu.CompilerParams(
            dimension_semantics=("parallel",),
            vmem_limit_bytes=64 * 1024 * 1024,
        ),
    )(q, k, v, pos_emb, wq_w, wk_w, wv_w, wp_w, wfc_w, pbu_v, pbv_v,
      gq, bq, gk, bk, gv, bv)


def relpos_mha_reference(q, k, v, pos_emb, params, x_len):
    """Pure-JAX mirror of the modified PyTorch forward (for validation)."""
    (wq3, wk3, wv3, wp3, pbu, pbv, wfc3, gq, bq, gk, bk, gv, bv) = params
    hi = lax.Precision.HIGHEST

    def ln(x, g, b):
        mu = x.mean(-1, keepdims=True)
        var = ((x - mu) ** 2).mean(-1, keepdims=True)
        return (x - mu) / jnp.sqrt(var + _LN_EPS) * g + b

    qh = jnp.matmul(ln(q, gq, bq), wq3, precision=hi)                     # (H,T,dk)
    kh = jnp.matmul(ln(k, gk, bk), wk3, precision=hi).transpose(0, 2, 1)  # (H,dk,T)
    vh = jnp.matmul(ln(v, gv, bv), wv3, precision=hi)                     # (H,T,dk)
    p = jnp.matmul(pos_emb, wp3, precision=hi).transpose(0, 2, 1)         # (H,dk,P)
    q_u = qh + pbu
    q_v = qh + pbv
    ac = jnp.matmul(q_u, kh, precision=hi)                                # (H,T,T)
    bd = jnp.matmul(q_v, p, precision=hi)                                 # (H,T,P)
    H, T, P = bd.shape
    xp = jnp.concatenate([jnp.zeros((H, x_len, 1), bd.dtype), bd], axis=-1)
    flat = xp.reshape(H, -1)
    bd_shift = flat[:, x_len:x_len + T * P].reshape(H, T, P)[:, :, :x_len]
    scores = ac + bd_shift
    attn = jax.nn.softmax(scores, axis=-1)
    o = jnp.matmul(attn, vh, precision=hi)                                # (H,T,dk)
    out = jnp.matmul(o, wfc3, precision=hi).sum(axis=0, keepdims=True)    # (1,T,D)
    return out + q


if __name__ == "__main__":
    H, D, T = 4, 32, 8
    d_k = D // H
    P = T  # pos_emb length == x_len == T

    key = jax.random.PRNGKey(0)
    keys = jax.random.split(key, 20)
    f32 = jnp.float32

    q = jax.random.normal(keys[0], (1, T, D), f32)
    k = jax.random.normal(keys[1], (1, T, D), f32)
    v = jax.random.normal(keys[2], (1, T, D), f32)
    pos_emb = jax.random.normal(keys[3], (1, P, D), f32)

    s = 0.1
    # __init__ shapes: nn.Linear(d_model, n_head*d_k, bias=False) -> (D, D)
    wq2 = s * jax.random.normal(keys[4], (D, D), f32)
    wk2 = s * jax.random.normal(keys[5], (D, D), f32)
    wv2 = s * jax.random.normal(keys[6], (D, D), f32)
    wp2 = s * jax.random.normal(keys[7], (D, D), f32)
    wfc2 = s * jax.random.normal(keys[8], (D, D), f32)          # fc: (d_model, H*d_v)
    pbu2 = s * jax.random.normal(keys[9], (H, d_k), f32)        # pos_bias_u (H, d_k)
    pbv2 = s * jax.random.normal(keys[10], (H, d_k), f32)       # pos_bias_v (H, d_k)
    gq = 1.0 + s * jax.random.normal(keys[11], (1, D), f32)     # LayerNorm params
    bq = s * jax.random.normal(keys[12], (1, D), f32)
    gk = 1.0 + s * jax.random.normal(keys[13], (1, D), f32)
    bk = s * jax.random.normal(keys[14], (1, D), f32)
    gv = 1.0 + s * jax.random.normal(keys[15], (1, D), f32)
    bv = s * jax.random.normal(keys[16], (1, D), f32)

    # Per-head tensors as consumed by the modified forward's torch.matmul(x, W):
    to3 = lambda w2: w2.reshape(H, d_k, D).transpose(0, 2, 1)   # (H, D, d_k)
    wq3, wk3, wv3, wp3 = to3(wq2), to3(wk2), to3(wv2), to3(wp2)
    wfc3 = wfc2.reshape(D, H, d_k).transpose(1, 2, 0)           # (H, d_k, D)
    pbu = pbu2.reshape(H, 1, d_k)
    pbv = pbv2.reshape(H, 1, d_k)

    params = (wq3, wk3, wv3, wp3, pbu, pbv, wfc3, gq, bq, gk, bk, gv, bv)

    out = relpos_mha_pallas(q, k, v, pos_emb, params, x_len=T)
    out = jax.block_until_ready(out)
    ref = relpos_mha_reference(q, k, v, pos_emb, params, x_len=T)
    assert out.shape == (1, T, D)
    # bf16 MXU operands (f32 accumulate) => looser tolerance than a pure-f32 path.
    np.testing.assert_allclose(np.asarray(out), np.asarray(ref), rtol=2e-2, atol=2e-2)
    print("KERNEL_OK")
</pallas_src>

<mosaic_0001>
module attributes {stable_mosaic.version = 11 : i64} {
  func.func @kernel(%arg0: i32, %arg1: memref<1x8x32xf32, #tpu.memory_space<vmem>>, %arg2: memref<1x8x32xf32, #tpu.memory_space<vmem>>, %arg3: memref<1x8x32xf32, #tpu.memory_space<vmem>>, %arg4: memref<1x8x32xf32, #tpu.memory_space<vmem>>, %arg5: memref<32x32xf32, #tpu.memory_space<vmem>>, %arg6: memref<32x32xf32, #tpu.memory_space<vmem>>, %arg7: memref<32x32xf32, #tpu.memory_space<vmem>>, %arg8: memref<32x32xf32, #tpu.memory_space<vmem>>, %arg9: memref<32x32xf32, #tpu.memory_space<vmem>>, %arg10: memref<1x32xf32, #tpu.memory_space<vmem>>, %arg11: memref<1x32xf32, #tpu.memory_space<vmem>>, %arg12: memref<1x32xf32, #tpu.memory_space<vmem>>, %arg13: memref<1x32xf32, #tpu.memory_space<vmem>>, %arg14: memref<1x32xf32, #tpu.memory_space<vmem>>, %arg15: memref<1x32xf32, #tpu.memory_space<vmem>>, %arg16: memref<1x32xf32, #tpu.memory_space<vmem>>, %arg17: memref<1x32xf32, #tpu.memory_space<vmem>>, %arg18: memref<1x8x32xf32, #tpu.memory_space<vmem>>) attributes {dimension_semantics = [#tpu.dimension_semantics<parallel>], iteration_bounds = array<i64: 1>, scalar_prefetch = 0 : i64, scratch_operands = 0 : i64, tpu.core_type = #tpu.core_type<tc>, window_params = [{pipeline_mode = #tpu.pipeline_mode<synchronous>, transform_indices = @transform_0, window_bounds = array<i64: 1, 8, 32>}, {pipeline_mode = #tpu.pipeline_mode<synchronous>, transform_indices = @transform_1, window_bounds = array<i64: 1, 8, 32>}, {pipeline_mode = #tpu.pipeline_mode<synchronous>, transform_indices = @transform_2, window_bounds = array<i64: 1, 8, 32>}, {pipeline_mode = #tpu.pipeline_mode<synchronous>, transform_indices = @transform_3, window_bounds = array<i64: 1, 8, 32>}, {pipeline_mode = #tpu.pipeline_mode<synchronous>, transform_indices = @transform_4, window_bounds = array<i64: 32, 32>}, {pipeline_mode = #tpu.pipeline_mode<synchronous>, transform_indices = @transform_5, window_bounds = array<i64: 32, 32>}, {pipeline_mode = #tpu.pipeline_mode<synchronous>, transform_indices = @transform_6, window_bounds = array<i64: 32, 32>}, {pipeline_mode = #tpu.pipeline_mode<synchronous>, transform_indices = @transform_7, window_bounds = array<i64: 32, 32>}, {pipeline_mode = #tpu.pipeline_mode<synchronous>, transform_indices = @transform_8, window_bounds = array<i64: 32, 32>}, {pipeline_mode = #tpu.pipeline_mode<synchronous>, transform_indices = @transform_9, window_bounds = array<i64: 1, 32>}, {pipeline_mode = #tpu.pipeline_mode<synchronous>, transform_indices = @transform_10, window_bounds = array<i64: 1, 32>}, {pipeline_mode = #tpu.pipeline_mode<synchronous>, transform_indices = @transform_11, window_bounds = array<i64: 1, 32>}, {pipeline_mode = #tpu.pipeline_mode<synchronous>, transform_indices = @transform_12, window_bounds = array<i64: 1, 32>}, {pipeline_mode = #tpu.pipeline_mode<synchronous>, transform_indices = @transform_13, window_bounds = array<i64: 1, 32>}, {pipeline_mode = #tpu.pipeline_mode<synchronous>, transform_indices = @transform_14, window_bounds = array<i64: 1, 32>}, {pipeline_mode = #tpu.pipeline_mode<synchronous>, transform_indices = @transform_15, window_bounds = array<i64: 1, 32>}, {pipeline_mode = #tpu.pipeline_mode<synchronous>, transform_indices = @transform_16, window_bounds = array<i64: 1, 32>}, {transform_indices = @transform_17, window_bounds = array<i64: 1, 8, 32>}]} {
    %c8_i32 = arith.constant 8 : i32
    %0 = arith.muli %arg0, %c8_i32 : i32
    %1 = tpu.assume_multiple %0, 8 : i32
    %c0 = arith.constant 0 : index
    %c0_0 = arith.constant 0 : index
    %2 = vector.load %arg12[%c0, %c0_0] : memref<1x32xf32, #tpu.memory_space<vmem>>, vector<1x32xf32>
    %c0_1 = arith.constant 0 : index
    %c0_2 = arith.constant 0 : index
    %3 = vector.load %arg13[%c0_1, %c0_2] : memref<1x32xf32, #tpu.memory_space<vmem>>, vector<1x32xf32>
    %c0_3 = arith.constant 0 : index
    %4 = arith.index_cast %1 : i32 to index
    %c0_4 = arith.constant 0 : index
    %5 = vector.load %arg1[%c0_3, %4, %c0_4] : memref<1x8x32xf32, #tpu.memory_space<vmem>>, vector<1x8x32xf32>
    %6 = vector.shape_cast %5 : vector<1x8x32xf32> to vector<8x32xf32>
    %cst = arith.constant dense<0.000000e+00> : vector<8xf32>
    %7 = vector.multi_reduction <add>, %6, %cst [1] : vector<8x32xf32> to vector<8xf32>
    %8 = vector.shape_cast %7 : vector<8xf32> to vector<8x1xf32>
    %cst_5 = arith.constant 3.200000e+01 : f32
    %9 = vector.broadcast %cst_5 : f32 to vector<8x1xf32>
    %10 = arith.divf %8, %9 : vector<8x1xf32>
    %11 = vector.broadcast %10 : vector<8x1xf32> to vector<8x32xf32>
    %12 = arith.subf %6, %11 : vector<8x32xf32>
    %13 = arith.mulf %12, %12 : vector<8x32xf32>
    %cst_6 = arith.constant dense<0.000000e+00> : vector<8xf32>
    %14 = vector.multi_reduction <add>, %13, %cst_6 [1] : vector<8x32xf32> to vector<8xf32>
    %15 = vector.shape_cast %14 : vector<8xf32> to vector<8x1xf32>
    %cst_7 = arith.constant 3.200000e+01 : f32
    %16 = vector.broadcast %cst_7 : f32 to vector<8x1xf32>
    %17 = arith.divf %15, %16 : vector<8x1xf32>
    %18 = vector.broadcast %10 : vector<8x1xf32> to vector<8x32xf32>
    %19 = arith.subf %6, %18 : vector<8x32xf32>
    %cst_8 = arith.constant 9.99999974E-6 : f32
    %20 = vector.broadcast %cst_8 : f32 to vector<8x1xf32>
    %21 = arith.addf %17, %20 : vector<8x1xf32>
    %22 = math.rsqrt %21 : vector<8x1xf32>
    %23 = vector.broadcast %22 : vector<8x1xf32> to vector<8x32xf32>
    %24 = arith.mulf %19, %23 : vector<8x32xf32>
    %25 = vector.broadcast %2 : vector<1x32xf32> to vector<8x32xf32>
    %26 = arith.mulf %24, %25 : vector<8x32xf32>
    %27 = vector.broadcast %3 : vector<1x32xf32> to vector<8x32xf32>
    %28 = arith.addf %26, %27 : vector<8x32xf32>
    %c0_9 = arith.constant 0 : index
    %c0_10 = arith.constant 0 : index
    %c0_11 = arith.constant 0 : index
    %29 = vector.load %arg2[%c0_9, %c0_10, %c0_11] : memref<1x8x32xf32, #tpu.memory_space<vmem>>, vector<1x8x32xf32>
    %30 = vector.shape_cast %29 : vector<1x8x32xf32> to vector<8x32xf32>
    %c0_12 = arith.constant 0 : index
    %c0_13 = arith.constant 0 : index
    %31 = vector.load %arg14[%c0_12, %c0_13] : memref<1x32xf32, #tpu.memory_space<vmem>>, vector<1x32xf32>
    %c0_14 = arith.constant 0 : index
    %c0_15 = arith.constant 0 : index
    %32 = vector.load %arg15[%c0_14, %c0_15] : memref<1x32xf32, #tpu.memory_space<vmem>>, vector<1x32xf32>
    %cst_16 = arith.constant dense<0.000000e+00> : vector<8xf32>
    %33 = vector.multi_reduction <add>, %30, %cst_16 [1] : vector<8x32xf32> to vector<8xf32>
    %34 = vector.shape_cast %33 : vector<8xf32> to vector<8x1xf32>
    %cst_17 = arith.constant 3.200000e+01 : f32
    %35 = vector.broadcast %cst_17 : f32 to vector<8x1xf32>
    %36 = arith.divf %34, %35 : vector<8x1xf32>
    %37 = vector.broadcast %36 : vector<8x1xf32> to vector<8x32xf32>
    %38 = arith.subf %30, %37 : vector<8x32xf32>
    %39 = arith.mulf %38, %38 : vector<8x32xf32>
    %cst_18 = arith.constant dense<0.000000e+00> : vector<8xf32>
    %40 = vector.multi_reduction <add>, %39, %cst_18 [1] : vector<8x32xf32> to vector<8xf32>
    %41 = vector.shape_cast %40 : vector<8xf32> to vector<8x1xf32>
    %cst_19 = arith.constant 3.200000e+01 : f32
    %42 = vector.broadcast %cst_19 : f32 to vector<8x1xf32>
    %43 = arith.divf %41, %42 : vector<8x1xf32>
    %44 = vector.broadcast %36 : vector<8x1xf32> to vector<8x32xf32>
    %45 = arith.subf %30, %44 : vector<8x32xf32>
    %cst_20 = arith.constant 9.99999974E-6 : f32
    %46 = vector.broadcast %cst_20 : f32 to vector<8x1xf32>
    %47 = arith.addf %43, %46 : vector<8x1xf32>
    %48 = math.rsqrt %47 : vector<8x1xf32>
    %49 = vector.broadcast %48 : vector<8x1xf32> to vector<8x32xf32>
    %50 = arith.mulf %45, %49 : vector<8x32xf32>
    %51 = vector.broadcast %31 : vector<1x32xf32> to vector<8x32xf32>
    %52 = arith.mulf %50, %51 : vector<8x32xf32>
    %53 = vector.broadcast %32 : vector<1x32xf32> to vector<8x32xf32>
    %54 = arith.addf %52, %53 : vector<8x32xf32>
    %c0_21 = arith.constant 0 : index
    %c0_22 = arith.constant 0 : index
    %c0_23 = arith.constant 0 : index
    %55 = vector.load %arg3[%c0_21, %c0_22, %c0_23] : memref<1x8x32xf32, #tpu.memory_space<vmem>>, vector<1x8x32xf32>
    %56 = vector.shape_cast %55 : vector<1x8x32xf32> to vector<8x32xf32>
    %c0_24 = arith.constant 0 : index
    %c0_25 = arith.constant 0 : index
    %57 = vector.load %arg16[%c0_24, %c0_25] : memref<1x32xf32, #tpu.memory_space<vmem>>, vector<1x32xf32>
    %c0_26 = arith.constant 0 : index
    %c0_27 = arith.constant 0 : index
    %58 = vector.load %arg17[%c0_26, %c0_27] : memref<1x32xf32, #tpu.memory_space<vmem>>, vector<1x32xf32>
    %cst_28 = arith.constant dense<0.000000e+00> : vector<8xf32>
    %59 = vector.multi_reduction <add>, %56, %cst_28 [1] : vector<8x32xf32> to vector<8xf32>
    %60 = vector.shape_cast %59 : vector<8xf32> to vector<8x1xf32>
    %cst_29 = arith.constant 3.200000e+01 : f32
    %61 = vector.broadcast %cst_29 : f32 to vector<8x1xf32>
    %62 = arith.divf %60, %61 : vector<8x1xf32>
    %63 = vector.broadcast %62 : vector<8x1xf32> to vector<8x32xf32>
    %64 = arith.subf %56, %63 : vector<8x32xf32>
    %65 = arith.mulf %64, %64 : vector<8x32xf32>
    %cst_30 = arith.constant dense<0.000000e+00> : vector<8xf32>
    %66 = vector.multi_reduction <add>, %65, %cst_30 [1] : vector<8x32xf32> to vector<8xf32>
    %67 = vector.shape_cast %66 : vector<8xf32> to vector<8x1xf32>
    %cst_31 = arith.constant 3.200000e+01 : f32
    %68 = vector.broadcast %cst_31 : f32 to vector<8x1xf32>
    %69 = arith.divf %67, %68 : vector<8x1xf32>
    %70 = vector.broadcast %62 : vector<8x1xf32> to vector<8x32xf32>
    %71 = arith.subf %56, %70 : vector<8x32xf32>
    %cst_32 = arith.constant 9.99999974E-6 : f32
    %72 = vector.broadcast %cst_32 : f32 to vector<8x1xf32>
    %73 = arith.addf %69, %72 : vector<8x1xf32>
    %74 = math.rsqrt %73 : vector<8x1xf32>
    %75 = vector.broadcast %74 : vector<8x1xf32> to vector<8x32xf32>
    %76 = arith.mulf %71, %75 : vector<8x32xf32>
    %77 = vector.broadcast %57 : vector<1x32xf32> to vector<8x32xf32>
    %78 = arith.mulf %76, %77 : vector<8x32xf32>
    %79 = vector.broadcast %58 : vector<1x32xf32> to vector<8x32xf32>
    %80 = arith.addf %78, %79 : vector<8x32xf32>
    %c0_33 = arith.constant 0 : index
    %c0_34 = arith.constant 0 : index
    %c0_35 = arith.constant 0 : index
    %81 = vector.load %arg4[%c0_33, %c0_34, %c0_35] : memref<1x8x32xf32, #tpu.memory_space<vmem>>, vector<1x8x32xf32>
    %82 = vector.shape_cast %81 : vector<1x8x32xf32> to vector<8x32xf32>
    %c8_i32_36 = arith.constant 8 : i32
    %83 = arith.addi %1, %c8_i32_36 : i32
    %c0_i32 = arith.constant 0 : i32
    %84 = arith.minsi %83, %c0_i32 : i32
    %85 = tpu.assume_multiple %84, 8 : i32
    %c0_37 = arith.constant 0 : index
    %86 = arith.index_cast %85 : i32 to index
    %c0_38 = arith.constant 0 : index
    %87 = vector.load %arg1[%c0_37, %86, %c0_38] : memref<1x8x32xf32, #tpu.memory_space<vmem>>, vector<1x1x32xf32>
    %88 = vector.shape_cast %87 : vector<1x1x32xf32> to vector<1x32xf32>
    %cst_39 = arith.constant dense<0.000000e+00> : vector<1xf32>
    %89 = vector.multi_reduction <add>, %88, %cst_39 [1] : vector<1x32xf32> to vector<1xf32>
    %90 = vector.shape_cast %89 : vector<1xf32> to vector<1x1xf32>
    %cst_40 = arith.constant 3.200000e+01 : f32
    %91 = vector.broadcast %cst_40 : f32 to vector<1x1xf32>
    %92 = arith.divf %90, %91 : vector<1x1xf32>
    %93 = vector.broadcast %92 : vector<1x1xf32> to vector<1x32xf32>
    %94 = arith.subf %88, %93 : vector<1x32xf32>
    %95 = arith.mulf %94, %94 : vector<1x32xf32>
    %cst_41 = arith.constant dense<0.000000e+00> : vector<1xf32>
    %96 = vector.multi_reduction <add>, %95, %cst_41 [1] : vector<1x32xf32> to vector<1xf32>
    %97 = vector.shape_cast %96 : vector<1xf32> to vector<1x1xf32>
    %cst_42 = arith.constant 3.200000e+01 : f32
    %98 = vector.broadcast %cst_42 : f32 to vector<1x1xf32>
    %99 = arith.divf %97, %98 : vector<1x1xf32>
    %100 = vector.broadcast %92 : vector<1x1xf32> to vector<1x32xf32>
    %101 = arith.subf %88, %100 : vector<1x32xf32>
    %cst_43 = arith.constant 9.99999974E-6 : f32
    %102 = vector.broadcast %cst_43 : f32 to vector<1x1xf32>
    %103 = arith.addf %99, %102 : vector<1x1xf32>
    %104 = math.rsqrt %103 : vector<1x1xf32>
    %105 = vector.broadcast %104 : vector<1x1xf32> to vector<1x32xf32>
    %106 = arith.mulf %101, %105 : vector<1x32xf32>
    %107 = arith.mulf %106, %2 : vector<1x32xf32>
    %108 = arith.addf %107, %3 : vector<1x32xf32>
    %c0_44 = arith.constant 0 : index
    %c0_45 = arith.constant 0 : index
    %109 = vector.load %arg5[%c0_44, %c0_45] : memref<32x32xf32, #tpu.memory_space<vmem>>, vector<32x32xf32>
    %110 = arith.truncf %109 : vector<32x32xf32> to vector<32x32xbf16>
    %111 = arith.truncf %28 : vector<8x32xf32> to vector<8x32xbf16>
    %cst_46 = arith.constant dense<0.000000e+00> : vector<8x32xf32>
    %112 = tpu.matmul %111, %110, %cst_46 {dimension_numbers = #tpu.dot_dimension_numbers<[1], [0], [0], [1], [0, 0, 1, 1], [], []>} : vector<8x32xbf16>, vector<32x32xbf16>, vector<8x32xf32> -> vector<8x32xf32>
    %113 = arith.truncf %108 : vector<1x32xf32> to vector<1x32xbf16>
    %cst_47 = arith.constant dense<0.000000e+00> : vector<1x32xf32>
    %114 = tpu.matmul %113, %110, %cst_47 {dimension_numbers = #tpu.dot_dimension_numbers<[1], [0], [0], [1], [0, 0, 1, 1], [], []>} : vector<1x32xbf16>, vector<32x32xbf16>, vector<1x32xf32> -> vector<1x32xf32>
    %115 = arith.truncf %54 : vector<8x32xf32> to vector<8x32xbf16>
    %c0_48 = arith.constant 0 : index
    %c0_49 = arith.constant 0 : index
    %116 = vector.load %arg6[%c0_48, %c0_49] : memref<32x32xf32, #tpu.memory_space<vmem>>, vector<32x32xf32>
    %117 = arith.truncf %116 : vector<32x32xf32> to vector<32x32xbf16>
    %cst_50 = arith.constant dense<0.000000e+00> : vector<8x32xf32>
    %118 = tpu.matmul %115, %117, %cst_50 {dimension_numbers = #tpu.dot_dimension_numbers<[1], [0], [0], [1], [0, 0, 1, 1], [], []>} : vector<8x32xbf16>, vector<32x32xbf16>, vector<8x32xf32> -> vector<8x32xf32>
    %119 = arith.truncf %80 : vector<8x32xf32> to vector<8x32xbf16>
    %c0_51 = arith.constant 0 : index
    %c0_52 = arith.constant 0 : index
    %120 = vector.load %arg7[%c0_51, %c0_52] : memref<32x32xf32, #tpu.memory_space<vmem>>, vector<32x32xf32>
    %121 = arith.truncf %120 : vector<32x32xf32> to vector<32x32xbf16>
    %cst_53 = arith.constant dense<0.000000e+00> : vector<8x32xf32>
    %122 = tpu.matmul %119, %121, %cst_53 {dimension_numbers = #tpu.dot_dimension_numbers<[1], [0], [0], [1], [0, 0, 1, 1], [], []>} : vector<8x32xbf16>, vector<32x32xbf16>, vector<8x32xf32> -> vector<8x32xf32>
    %123 = arith.truncf %82 : vector<8x32xf32> to vector<8x32xbf16>
    %c0_54 = arith.constant 0 : index
    %c0_55 = arith.constant 0 : index
    %124 = vector.load %arg8[%c0_54, %c0_55] : memref<32x32xf32, #tpu.memory_space<vmem>>, vector<32x32xf32>
    %125 = arith.truncf %124 : vector<32x32xf32> to vector<32x32xbf16>
    %cst_56 = arith.constant dense<0.000000e+00> : vector<8x32xf32>
    %126 = tpu.matmul %123, %125, %cst_56 {dimension_numbers = #tpu.dot_dimension_numbers<[1], [0], [0], [1], [0, 0, 1, 1], [], []>} : vector<8x32xbf16>, vector<32x32xbf16>, vector<8x32xf32> -> vector<8x32xf32>
    %c0_57 = arith.constant 0 : index
    %c0_58 = arith.constant 0 : index
    %127 = vector.load %arg10[%c0_57, %c0_58] : memref<1x32xf32, #tpu.memory_space<vmem>>, vector<1x32xf32>
    %128 = vector.broadcast %127 : vector<1x32xf32> to vector<8x32xf32>
    %129 = arith.addf %112, %128 : vector<8x32xf32>
    %130 = tpu.concatenate %112, %114 in 0 : vector<8x32xf32>, vector<1x32xf32> -> vector<9x32xf32>
    %c0_59 = arith.constant 0 : index
    %c0_60 = arith.constant 0 : index
    %131 = vector.load %arg11[%c0_59, %c0_60] : memref<1x32xf32, #tpu.memory_space<vmem>>, vector<1x32xf32>
    %132 = vector.broadcast %131 : vector<1x32xf32> to vector<9x32xf32>
    %133 = arith.addf %130, %132 : vector<9x32xf32>
    %134 = tpu.iota {dimensions = array<i32: 0>} : vector<8x18xi32>
    %135 = vector.broadcast %1 : i32 to vector<8x18xi32>
    %136 = arith.addi %135, %134 : vector<8x18xi32>
    %137 = vector.extract_strided_slice %129 {offsets = [0, 0], sizes = [8, 8], strides = [1, 1]} : vector<8x32xf32> to vector<8x8xf32>
    %138 = arith.truncf %137 : vector<8x8xf32> to vector<8x8xbf16>
    %139 = vector.extract_strided_slice %118 {offsets = [0, 0], sizes = [8, 8], strides = [1, 1]} : vector<8x32xf32> to vector<8x8xf32>
    %140 = arith.truncf %139 : vector<8x8xf32> to vector<8x8xbf16>
    %cst_61 = arith.constant dense<0.000000e+00> : vector<8x8xf32>
    %141 = tpu.matmul %138, %140, %cst_61 {dimension_numbers = #tpu.dot_dimension_numbers<[1], [1], [0], [0], [0, 0, 1, 0], [], []>} : vector<8x8xbf16>, vector<8x8xbf16>, vector<8x8xf32> -> vector<8x8xf32>
    %142 = vector.extract_strided_slice %133 {offsets = [0, 0], sizes = [9, 8], strides = [1, 1]} : vector<9x32xf32> to vector<9x8xf32>
    %143 = arith.truncf %142 : vector<9x8xf32> to vector<9x8xbf16>
    %144 = vector.extract_strided_slice %126 {offsets = [0, 0], sizes = [8, 8], strides = [1, 1]} : vector<8x32xf32> to vector<8x8xf32>
    %145 = arith.truncf %144 : vector<8x8xf32> to vector<8x8xbf16>
    %cst_62 = arith.constant dense<0.000000e+00> : vector<9x8xf32>
    %146 = tpu.matmul %143, %145, %cst_62 {dimension_numbers = #tpu.dot_dimension_numbers<[1], [1], [0], [0], [0, 0, 1, 0], [], []>} : vector<9x8xbf16>, vector<8x8xbf16>, vector<9x8xf32> -> vector<9x8xf32>
    %cst_63 = arith.constant 0.000000e+00 : f32
    %147 = vector.broadcast %cst_63 : f32 to vector<9x1xf32>
    %148 = tpu.concatenate %147, %146 in 1 : vector<9x1xf32>, vector<9x8xf32> -> vector<9x9xf32>
    %149 = vector.extract_strided_slice %148 {offsets = [0, 0], sizes = [8, 9], strides = [1, 1]} : vector<9x9xf32> to vector<8x9xf32>
    %150 = vector.extract_strided_slice %148 {offsets = [1, 0], sizes = [8, 9], strides = [1, 1]} : vector<9x9xf32> to vector<8x9xf32>
    %151 = tpu.concatenate %149, %150 in 1 : vector<8x9xf32>, vector<8x9xf32> -> vector<8x18xf32>
    %152 = vector.extract_strided_slice %151 {offsets = [0, 17], sizes = [8, 1], strides = [1, 1]} : vector<8x18xf32> to vector<8x1xf32>
    %153 = vector.extract_strided_slice %151 {offsets = [0, 0], sizes = [8, 17], strides = [1, 1]} : vector<8x18xf32> to vector<8x17xf32>
    %154 = tpu.concatenate %152, %153 in 1 : vector<8x1xf32>, vector<8x17xf32> -> vector<8x18xf32>
    %c0_i32_64 = arith.constant 0 : i32
    %155 = vector.broadcast %c0_i32_64 : i32 to vector<8x18xi32>
    %156 = arith.shrsi %136, %155 : vector<8x18xi32>
    %c1_i32 = arith.constant 1 : i32
    %157 = vector.broadcast %c1_i32 : i32 to vector<8x18xi32>
    %158 = arith.andi %156, %157 : vector<8x18xi32>
    %c1_i32_65 = arith.constant 1 : i32
    %159 = vector.broadcast %c1_i32_65 : i32 to vector<8x18xi32>
    %160 = arith.cmpi eq, %158, %159 : vector<8x18xi32>
    %161 = arith.select %160, %154, %151 : vector<8x18xi1>, vector<8x18xf32>
    %162 = vector.extract_strided_slice %161 {offsets = [0, 16], sizes = [8, 2], strides = [1, 1]} : vector<8x18xf32> to vector<8x2xf32>
    %163 = vector.extract_strided_slice %161 {offsets = [0, 0], sizes = [8, 16], strides = [1, 1]} : vector<8x18xf32> to vector<8x16xf32>
    %164 = tpu.concatenate %162, %163 in 1 : vector<8x2xf32>, vector<8x16xf32> -> vector<8x18xf32>
    %c1_i32_66 = arith.constant 1 : i32
    %165 = vector.broadcast %c1_i32_66 : i32 to vector<8x18xi32>
    %166 = arith.shrsi %136, %165 : vector<8x18xi32>
    %c1_i32_67 = arith.constant 1 : i32
    %167 = vector.broadcast %c1_i32_67 : i32 to vector<8x18xi32>
    %168 = arith.andi %166, %167 : vector<8x18xi32>
    %c1_i32_68 = arith.constant 1 : i32
    %169 = vector.broadcast %c1_i32_68 : i32 to vector<8x18xi32>
    %170 = arith.cmpi eq, %168, %169 : vector<8x18xi32>
    %171 = arith.select %170, %164, %161 : vector<8x18xi1>, vector<8x18xf32>
    %172 = vector.extract_strided_slice %171 {offsets = [0, 14], sizes = [8, 4], strides = [1, 1]} : vector<8x18xf32> to vector<8x4xf32>
    %173 = vector.extract_strided_slice %171 {offsets = [0, 0], sizes = [8, 14], strides = [1, 1]} : vector<8x18xf32> to vector<8x14xf32>
    %174 = tpu.concatenate %172, %173 in 1 : vector<8x4xf32>, vector<8x14xf32> -> vector<8x18xf32>
    %c2_i32 = arith.constant 2 : i32
    %175 = vector.broadcast %c2_i32 : i32 to vector<8x18xi32>
    %176 = arith.shrsi %136, %175 : vector<8x18xi32>
    %c1_i32_69 = arith.constant 1 : i32
    %177 = vector.broadcast %c1_i32_69 : i32 to vector<8x18xi32>
    %178 = arith.andi %176, %177 : vector<8x18xi32>
    %c1_i32_70 = arith.constant 1 : i32
    %179 = vector.broadcast %c1_i32_70 : i32 to vector<8x18xi32>
    %180 = arith.cmpi eq, %178, %179 : vector<8x18xi32>
    %181 = arith.select %180, %174, %171 : vector<8x18xi1>, vector<8x18xf32>
    %182 = vector.extract_strided_slice %181 {offsets = [0, 8], sizes = [8, 8], strides = [1, 1]} : vector<8x18xf32> to vector<8x8xf32>
    %183 = arith.addf %141, %182 : vector<8x8xf32>
    %cst_71 = arith.constant dense<0xFF800000> : vector<8xf32>
    %184 = vector.multi_reduction <maximumf>, %183, %cst_71 [1] : vector<8x8xf32> to vector<8xf32>
    %185 = vector.shape_cast %184 : vector<8xf32> to vector<8x1xf32>
    %186 = vector.broadcast %185 : vector<8x1xf32> to vector<8x8xf32>
    %187 = arith.subf %183, %186 : vector<8x8xf32>
    %188 = math.exp %187 : vector<8x8xf32>
    %cst_72 = arith.constant dense<0.000000e+00> : vector<8xf32>
    %189 = vector.multi_reduction <add>, %188, %cst_72 [1] : vector<8x8xf32> to vector<8xf32>
    %190 = vector.shape_cast %189 : vector<8xf32> to vector<8x1xf32>
    %191 = tpu.reciprocal %190 {approx = true} : vector<8x1xf32> -> vector<8x1xf32>
    %192 = vector.broadcast %191 : vector<8x1xf32> to vector<8x8xf32>
    %193 = arith.mulf %188, %192 : vector<8x8xf32>
    %194 = arith.truncf %193 : vector<8x8xf32> to vector<8x8xbf16>
    %195 = vector.extract_strided_slice %122 {offsets = [0, 0], sizes = [8, 8], strides = [1, 1]} : vector<8x32xf32> to vector<8x8xf32>
    %196 = arith.truncf %195 : vector<8x8xf32> to vector<8x8xbf16>
    %cst_73 = arith.constant dense<0.000000e+00> : vector<8x8xf32>
    %197 = tpu.matmul %194, %196, %cst_73 {dimension_numbers = #tpu.dot_dimension_numbers<[1], [0], [0], [1], [0, 0, 1, 1], [], []>} : vector<8x8xbf16>, vector<8x8xbf16>, vector<8x8xf32> -> vector<8x8xf32>
    %198 = vector.extract_strided_slice %129 {offsets = [0, 8], sizes = [8, 8], strides = [1, 1]} : vector<8x32xf32> to vector<8x8xf32>
    %199 = arith.truncf %198 : vector<8x8xf32> to vector<8x8xbf16>
    %200 = vector.extract_strided_slice %118 {offsets = [0, 8], sizes = [8, 8], strides = [1, 1]} : vector<8x32xf32> to vector<8x8xf32>
    %201 = arith.truncf %200 : vector<8x8xf32> to vector<8x8xbf16>
    %cst_74 = arith.constant dense<0.000000e+00> : vector<8x8xf32>
    %202 = tpu.matmul %199, %201, %cst_74 {dimension_numbers = #tpu.dot_dimension_numbers<[1], [1], [0], [0], [0, 0, 1, 0], [], []>} : vector<8x8xbf16>, vector<8x8xbf16>, vector<8x8xf32> -> vector<8x8xf32>
    %203 = vector.extract_strided_slice %133 {offsets = [0, 8], sizes = [9, 8], strides = [1, 1]} : vector<9x32xf32> to vector<9x8xf32>
    %204 = arith.truncf %203 : vector<9x8xf32> to vector<9x8xbf16>
    %205 = vector.extract_strided_slice %126 {offsets = [0, 8], sizes = [8, 8], strides = [1, 1]} : vector<8x32xf32> to vector<8x8xf32>
    %206 = arith.truncf %205 : vector<8x8xf32> to vector<8x8xbf16>
    %cst_75 = arith.constant dense<0.000000e+00> : vector<9x8xf32>
    %207 = tpu.matmul %204, %206, %cst_75 {dimension_numbers = #tpu.dot_dimension_numbers<[1], [1], [0], [0], [0, 0, 1, 0], [], []>} : vector<9x8xbf16>, vector<8x8xbf16>, vector<9x8xf32> -> vector<9x8xf32>
    %cst_76 = arith.constant 0.000000e+00 : f32
    %208 = vector.broadcast %cst_76 : f32 to vector<9x1xf32>
    %209 = tpu.concatenate %208, %207 in 1 : vector<9x1xf32>, vector<9x8xf32> -> vector<9x9xf32>
    %210 = vector.extract_strided_slice %209 {offsets = [0, 0], sizes = [8, 9], strides = [1, 1]} : vector<9x9xf32> to vector<8x9xf32>
    %211 = vector.extract_strided_slice %209 {offsets = [1, 0], sizes = [8, 9], strides = [1, 1]} : vector<9x9xf32> to vector<8x9xf32>
    %212 = tpu.concatenate %210, %211 in 1 : vector<8x9xf32>, vector<8x9xf32> -> vector<8x18xf32>
    %213 = vector.extract_strided_slice %212 {offsets = [0, 17], sizes = [8, 1], strides = [1, 1]} : vector<8x18xf32> to vector<8x1xf32>
    %214 = vector.extract_strided_slice %212 {offsets = [0, 0], sizes = [8, 17], strides = [1, 1]} : vector<8x18xf32> to vector<8x17xf32>
    %215 = tpu.concatenate %213, %214 in 1 : vector<8x1xf32>, vector<8x17xf32> -> vector<8x18xf32>
    %c0_i32_77 = arith.constant 0 : i32
    %216 = vector.broadcast %c0_i32_77 : i32 to vector<8x18xi32>
    %217 = arith.shrsi %136, %216 : vector<8x18xi32>
    %c1_i32_78 = arith.constant 1 : i32
    %218 = vector.broadcast %c1_i32_78 : i32 to vector<8x18xi32>
    %219 = arith.andi %217, %218 : vector<8x18xi32>
    %c1_i32_79 = arith.constant 1 : i32
    %220 = vector.broadcast %c1_i32_79 : i32 to vector<8x18xi32>
    %221 = arith.cmpi eq, %219, %220 : vector<8x18xi32>
    %222 = arith.select %221, %215, %212 : vector<8x18xi1>, vector<8x18xf32>
    %223 = vector.extract_strided_slice %222 {offsets = [0, 16], sizes = [8, 2], strides = [1, 1]} : vector<8x18xf32> to vector<8x2xf32>
    %224 = vector.extract_strided_slice %222 {offsets = [0, 0], sizes = [8, 16], strides = [1, 1]} : vector<8x18xf32> to vector<8x16xf32>
    %225 = tpu.concatenate %223, %224 in 1 : vector<8x2xf32>, vector<8x16xf32> -> vector<8x18xf32>
    %c1_i32_80 = arith.constant 1 : i32
    %226 = vector.broadcast %c1_i32_80 : i32 to vector<8x18xi32>
    %227 = arith.shrsi %136, %226 : vector<8x18xi32>
    %c1_i32_81 = arith.constant 1 : i32
    %228 = vector.broadcast %c1_i32_81 : i32 to vector<8x18xi32>
    %229 = arith.andi %227, %228 : vector<8x18xi32>
    %c1_i32_82 = arith.constant 1 : i32
    %230 = vector.broadcast %c1_i32_82 : i32 to vector<8x18xi32>
    %231 = arith.cmpi eq, %229, %230 : vector<8x18xi32>
    %232 = arith.select %231, %225, %222 : vector<8x18xi1>, vector<8x18xf32>
    %233 = vector.extract_strided_slice %232 {offsets = [0, 14], sizes = [8, 4], strides = [1, 1]} : vector<8x18xf32> to vector<8x4xf32>
    %234 = vector.extract_strided_slice %232 {offsets = [0, 0], sizes = [8, 14], strides = [1, 1]} : vector<8x18xf32> to vector<8x14xf32>
    %235 = tpu.concatenate %233, %234 in 1 : vector<8x4xf32>, vector<8x14xf32> -> vector<8x18xf32>
    %c2_i32_83 = arith.constant 2 : i32
    %236 = vector.broadcast %c2_i32_83 : i32 to vector<8x18xi32>
    %237 = arith.shrsi %136, %236 : vector<8x18xi32>
    %c1_i32_84 = arith.constant 1 : i32
    %238 = vector.broadcast %c1_i32_84 : i32 to vector<8x18xi32>
    %239 = arith.andi %237, %238 : vector<8x18xi32>
    %c1_i32_85 = arith.constant 1 : i32
    %240 = vector.broadcast %c1_i32_85 : i32 to vector<8x18xi32>
    %241 = arith.cmpi eq, %239, %240 : vector<8x18xi32>
    %242 = arith.select %241, %235, %232 : vector<8x18xi1>, vector<8x18xf32>
    %243 = vector.extract_strided_slice %242 {offsets = [0, 8], sizes = [8, 8], strides = [1, 1]} : vector<8x18xf32> to vector<8x8xf32>
    %244 = arith.addf %202, %243 : vector<8x8xf32>
    %cst_86 = arith.constant dense<0xFF800000> : vector<8xf32>
    %245 = vector.multi_reduction <maximumf>, %244, %cst_86 [1] : vector<8x8xf32> to vector<8xf32>
    %246 = vector.shape_cast %245 : vector<8xf32> to vector<8x1xf32>
    %247 = vector.broadcast %246 : vector<8x1xf32> to vector<8x8xf32>
    %248 = arith.subf %244, %247 : vector<8x8xf32>
    %249 = math.exp %248 : vector<8x8xf32>
    %cst_87 = arith.constant dense<0.000000e+00> : vector<8xf32>
    %250 = vector.multi_reduction <add>, %249, %cst_87 [1] : vector<8x8xf32> to vector<8xf32>
    %251 = vector.shape_cast %250 : vector<8xf32> to vector<8x1xf32>
    %252 = tpu.reciprocal %251 {approx = true} : vector<8x1xf32> -> vector<8x1xf32>
    %253 = vector.broadcast %252 : vector<8x1xf32> to vector<8x8xf32>
    %254 = arith.mulf %249, %253 : vector<8x8xf32>
    %255 = arith.truncf %254 : vector<8x8xf32> to vector<8x8xbf16>
    %256 = vector.extract_strided_slice %122 {offsets = [0, 8], sizes = [8, 8], strides = [1, 1]} : vector<8x32xf32> to vector<8x8xf32>
    %257 = arith.truncf %256 : vector<8x8xf32> to vector<8x8xbf16>
    %cst_88 = arith.constant dense<0.000000e+00> : vector<8x8xf32>
    %258 = tpu.matmul %255, %257, %cst_88 {dimension_numbers = #tpu.dot_dimension_numbers<[1], [0], [0], [1], [0, 0, 1, 1], [], []>} : vector<8x8xbf16>, vector<8x8xbf16>, vector<8x8xf32> -> vector<8x8xf32>
    %259 = vector.extract_strided_slice %129 {offsets = [0, 16], sizes = [8, 8], strides = [1, 1]} : vector<8x32xf32> to vector<8x8xf32>
    %260 = arith.truncf %259 : vector<8x8xf32> to vector<8x8xbf16>
    %261 = vector.extract_strided_slice %118 {offsets = [0, 16], sizes = [8, 8], strides = [1, 1]} : vector<8x32xf32> to vector<8x8xf32>
    %262 = arith.truncf %261 : vector<8x8xf32> to vector<8x8xbf16>
    %cst_89 = arith.constant dense<0.000000e+00> : vector<8x8xf32>
    %263 = tpu.matmul %260, %262, %cst_89 {dimension_numbers = #tpu.dot_dimension_numbers<[1], [1], [0], [0], [0, 0, 1, 0], [], []>} : vector<8x8xbf16>, vector<8x8xbf16>, vector<8x8xf32> -> vector<8x8xf32>
    %264 = vector.extract_strided_slice %133 {offsets = [0, 16], sizes = [9, 8], strides = [1, 1]} : vector<9x32xf32> to vector<9x8xf32>
    %265 = arith.truncf %264 : vector<9x8xf32> to vector<9x8xbf16>
    %266 = vector.extract_strided_slice %126 {offsets = [0, 16], sizes = [8, 8], strides = [1, 1]} : vector<8x32xf32> to vector<8x8xf32>
    %267 = arith.truncf %266 : vector<8x8xf32> to vector<8x8xbf16>
    %cst_90 = arith.constant dense<0.000000e+00> : vector<9x8xf32>
    %268 = tpu.matmul %265, %267, %cst_90 {dimension_numbers = #tpu.dot_dimension_numbers<[1], [1], [0], [0], [0, 0, 1, 0], [], []>} : vector<9x8xbf16>, vector<8x8xbf16>, vector<9x8xf32> -> vector<9x8xf32>
    %cst_91 = arith.constant 0.000000e+00 : f32
    %269 = vector.broadcast %cst_91 : f32 to vector<9x1xf32>
    %270 = tpu.concatenate %269, %268 in 1 : vector<9x1xf32>, vector<9x8xf32> -> vector<9x9xf32>
    %271 = vector.extract_strided_slice %270 {offsets = [0, 0], sizes = [8, 9], strides = [1, 1]} : vector<9x9xf32> to vector<8x9xf32>
    %272 = vector.extract_strided_slice %270 {offsets = [1, 0], sizes = [8, 9], strides = [1, 1]} : vector<9x9xf32> to vector<8x9xf32>
    %273 = tpu.concatenate %271, %272 in 1 : vector<8x9xf32>, vector<8x9xf32> -> vector<8x18xf32>
    %274 = vector.extract_strided_slice %273 {offsets = [0, 17], sizes = [8, 1], strides = [1, 1]} : vector<8x18xf32> to vector<8x1xf32>
    %275 = vector.extract_strided_slice %273 {offsets = [0, 0], sizes = [8, 17], strides = [1, 1]} : vector<8x18xf32> to vector<8x17xf32>
    %276 = tpu.concatenate %274, %275 in 1 : vector<8x1xf32>, vector<8x17xf32> -> vector<8x18xf32>
    %c0_i32_92 = arith.constant 0 : i32
    %277 = vector.broadcast %c0_i32_92 : i32 to vector<8x18xi32>
    %278 = arith.shrsi %136, %277 : vector<8x18xi32>
    %c1_i32_93 = arith.constant 1 : i32
    %279 = vector.broadcast %c1_i32_93 : i32 to vector<8x18xi32>
    %280 = arith.andi %278, %279 : vector<8x18xi32>
    %c1_i32_94 = arith.constant 1 : i32
    %281 = vector.broadcast %c1_i32_94 : i32 to vector<8x18xi32>
    %282 = arith.cmpi eq, %280, %281 : vector<8x18xi32>
    %283 = arith.select %282, %276, %273 : vector<8x18xi1>, vector<8x18xf32>
    %284 = vector.extract_strided_slice %283 {offsets = [0, 16], sizes = [8, 2], strides = [1, 1]} : vector<8x18xf32> to vector<8x2xf32>
    %285 = vector.extract_strided_slice %283 {offsets = [0, 0], sizes = [8, 16], strides = [1, 1]} : vector<8x18xf32> to vector<8x16xf32>
    %286 = tpu.concatenate %284, %285 in 1 : vector<8x2xf32>, vector<8x16xf32> -> vector<8x18xf32>
    %c1_i32_95 = arith.constant 1 : i32
    %287 = vector.broadcast %c1_i32_95 : i32 to vector<8x18xi32>
    %288 = arith.shrsi %136, %287 : vector<8x18xi32>
    %c1_i32_96 = arith.constant 1 : i32
    %289 = vector.broadcast %c1_i32_96 : i32 to vector<8x18xi32>
    %290 = arith.andi %288, %289 : vector<8x18xi32>
    %c1_i32_97 = arith.constant 1 : i32
    %291 = vector.broadcast %c1_i32_97 : i32 to vector<8x18xi32>
    %292 = arith.cmpi eq, %290, %291 : vector<8x18xi32>
    %293 = arith.select %292, %286, %283 : vector<8x18xi1>, vector<8x18xf32>
    %294 = vector.extract_strided_slice %293 {offsets = [0, 14], sizes = [8, 4], strides = [1, 1]} : vector<8x18xf32> to vector<8x4xf32>
    %295 = vector.extract_strided_slice %293 {offsets = [0, 0], sizes = [8, 14], strides = [1, 1]} : vector<8x18xf32> to vector<8x14xf32>
    %296 = tpu.concatenate %294, %295 in 1 : vector<8x4xf32>, vector<8x14xf32> -> vector<8x18xf32>
    %c2_i32_98 = arith.constant 2 : i32
    %297 = vector.broadcast %c2_i32_98 : i32 to vector<8x18xi32>
    %298 = arith.shrsi %136, %297 : vector<8x18xi32>
    %c1_i32_99 = arith.constant 1 : i32
    %299 = vector.broadcast %c1_i32_99 : i32 to vector<8x18xi32>
    %300 = arith.andi %298, %299 : vector<8x18xi32>
    %c1_i32_100 = arith.constant 1 : i32
    %301 = vector.broadcast %c1_i32_100 : i32 to vector<8x18xi32>
    %302 = arith.cmpi eq, %300, %301 : vector<8x18xi32>
    %303 = arith.select %302, %296, %293 : vector<8x18xi1>, vector<8x18xf32>
    %304 = vector.extract_strided_slice %303 {offsets = [0, 8], sizes = [8, 8], strides = [1, 1]} : vector<8x18xf32> to vector<8x8xf32>
    %305 = arith.addf %263, %304 : vector<8x8xf32>
    %cst_101 = arith.constant dense<0xFF800000> : vector<8xf32>
    %306 = vector.multi_reduction <maximumf>, %305, %cst_101 [1] : vector<8x8xf32> to vector<8xf32>
    %307 = vector.shape_cast %306 : vector<8xf32> to vector<8x1xf32>
    %308 = vector.broadcast %307 : vector<8x1xf32> to vector<8x8xf32>
    %309 = arith.subf %305, %308 : vector<8x8xf32>
    %310 = math.exp %309 : vector<8x8xf32>
    %cst_102 = arith.constant dense<0.000000e+00> : vector<8xf32>
    %311 = vector.multi_reduction <add>, %310, %cst_102 [1] : vector<8x8xf32> to vector<8xf32>
    %312 = vector.shape_cast %311 : vector<8xf32> to vector<8x1xf32>
    %313 = tpu.reciprocal %312 {approx = true} : vector<8x1xf32> -> vector<8x1xf32>
    %314 = vector.broadcast %313 : vector<8x1xf32> to vector<8x8xf32>
    %315 = arith.mulf %310, %314 : vector<8x8xf32>
    %316 = arith.truncf %315 : vector<8x8xf32> to vector<8x8xbf16>
    %317 = vector.extract_strided_slice %122 {offsets = [0, 16], sizes = [8, 8], strides = [1, 1]} : vector<8x32xf32> to vector<8x8xf32>
    %318 = arith.truncf %317 : vector<8x8xf32> to vector<8x8xbf16>
    %cst_103 = arith.constant dense<0.000000e+00> : vector<8x8xf32>
    %319 = tpu.matmul %316, %318, %cst_103 {dimension_numbers = #tpu.dot_dimension_numbers<[1], [0], [0], [1], [0, 0, 1, 1], [], []>} : vector<8x8xbf16>, vector<8x8xbf16>, vector<8x8xf32> -> vector<8x8xf32>
    %320 = vector.extract_strided_slice %129 {offsets = [0, 24], sizes = [8, 8], strides = [1, 1]} : vector<8x32xf32> to vector<8x8xf32>
    %321 = arith.truncf %320 : vector<8x8xf32> to vector<8x8xbf16>
    %322 = vector.extract_strided_slice %118 {offsets = [0, 24], sizes = [8, 8], strides = [1, 1]} : vector<8x32xf32> to vector<8x8xf32>
    %323 = arith.truncf %322 : vector<8x8xf32> to vector<8x8xbf16>
    %cst_104 = arith.constant dense<0.000000e+00> : vector<8x8xf32>
    %324 = tpu.matmul %321, %323, %cst_104 {dimension_numbers = #tpu.dot_dimension_numbers<[1], [1], [0], [0], [0, 0, 1, 0], [], []>} : vector<8x8xbf16>, vector<8x8xbf16>, vector<8x8xf32> -> vector<8x8xf32>
    %325 = vector.extract_strided_slice %133 {offsets = [0, 24], sizes = [9, 8], strides = [1, 1]} : vector<9x32xf32> to vector<9x8xf32>
    %326 = arith.truncf %325 : vector<9x8xf32> to vector<9x8xbf16>
    %327 = vector.extract_strided_slice %126 {offsets = [0, 24], sizes = [8, 8], strides = [1, 1]} : vector<8x32xf32> to vector<8x8xf32>
    %328 = arith.truncf %327 : vector<8x8xf32> to vector<8x8xbf16>
    %cst_105 = arith.constant dense<0.000000e+00> : vector<9x8xf32>
    %329 = tpu.matmul %326, %328, %cst_105 {dimension_numbers = #tpu.dot_dimension_numbers<[1], [1], [0], [0], [0, 0, 1, 0], [], []>} : vector<9x8xbf16>, vector<8x8xbf16>, vector<9x8xf32> -> vector<9x8xf32>
    %cst_106 = arith.constant 0.000000e+00 : f32
    %330 = vector.broadcast %cst_106 : f32 to vector<9x1xf32>
    %331 = tpu.concatenate %330, %329 in 1 : vector<9x1xf32>, vector<9x8xf32> -> vector<9x9xf32>
    %332 = vector.extract_strided_slice %331 {offsets = [0, 0], sizes = [8, 9], strides = [1, 1]} : vector<9x9xf32> to vector<8x9xf32>
    %333 = vector.extract_strided_slice %331 {offsets = [1, 0], sizes = [8, 9], strides = [1, 1]} : vector<9x9xf32> to vector<8x9xf32>
    %334 = tpu.concatenate %332, %333 in 1 : vector<8x9xf32>, vector<8x9xf32> -> vector<8x18xf32>
    %335 = vector.extract_strided_slice %334 {offsets = [0, 17], sizes = [8, 1], strides = [1, 1]} : vector<8x18xf32> to vector<8x1xf32>
    %336 = vector.extract_strided_slice %334 {offsets = [0, 0], sizes = [8, 17], strides = [1, 1]} : vector<8x18xf32> to vector<8x17xf32>
    %337 = tpu.concatenate %335, %336 in 1 : vector<8x1xf32>, vector<8x17xf32> -> vector<8x18xf32>
    %c0_i32_107 = arith.constant 0 : i32
    %338 = vector.broadcast %c0_i32_107 : i32 to vector<8x18xi32>
    %339 = arith.shrsi %136, %338 : vector<8x18xi32>
    %c1_i32_108 = arith.constant 1 : i32
    %340 = vector.broadcast %c1_i32_108 : i32 to vector<8x18xi32>
    %341 = arith.andi %339, %340 : vector<8x18xi32>
    %c1_i32_109 = arith.constant 1 : i32
    %342 = vector.broadcast %c1_i32_109 : i32 to vector<8x18xi32>
    %343 = arith.cmpi eq, %341, %342 : vector<8x18xi32>
    %344 = arith.select %343, %337, %334 : vector<8x18xi1>, vector<8x18xf32>
    %345 = vector.extract_strided_slice %344 {offsets = [0, 16], sizes = [8, 2], strides = [1, 1]} : vector<8x18xf32> to vector<8x2xf32>
    %346 = vector.extract_strided_slice %344 {offsets = [0, 0], sizes = [8, 16], strides = [1, 1]} : vector<8x18xf32> to vector<8x16xf32>
    %347 = tpu.concatenate %345, %346 in 1 : vector<8x2xf32>, vector<8x16xf32> -> vector<8x18xf32>
    %c1_i32_110 = arith.constant 1 : i32
    %348 = vector.broadcast %c1_i32_110 : i32 to vector<8x18xi32>
    %349 = arith.shrsi %136, %348 : vector<8x18xi32>
    %c1_i32_111 = arith.constant 1 : i32
    %350 = vector.broadcast %c1_i32_111 : i32 to vector<8x18xi32>
    %351 = arith.andi %349, %350 : vector<8x18xi32>
    %c1_i32_112 = arith.constant 1 : i32
    %352 = vector.broadcast %c1_i32_112 : i32 to vector<8x18xi32>
    %353 = arith.cmpi eq, %351, %352 : vector<8x18xi32>
    %354 = arith.select %353, %347, %344 : vector<8x18xi1>, vector<8x18xf32>
    %355 = vector.extract_strided_slice %354 {offsets = [0, 14], sizes = [8, 4], strides = [1, 1]} : vector<8x18xf32> to vector<8x4xf32>
    %356 = vector.extract_strided_slice %354 {offsets = [0, 0], sizes = [8, 14], strides = [1, 1]} : vector<8x18xf32> to vector<8x14xf32>
    %357 = tpu.concatenate %355, %356 in 1 : vector<8x4xf32>, vector<8x14xf32> -> vector<8x18xf32>
    %c2_i32_113 = arith.constant 2 : i32
    %358 = vector.broadcast %c2_i32_113 : i32 to vector<8x18xi32>
    %359 = arith.shrsi %136, %358 : vector<8x18xi32>
    %c1_i32_114 = arith.constant 1 : i32
    %360 = vector.broadcast %c1_i32_114 : i32 to vector<8x18xi32>
    %361 = arith.andi %359, %360 : vector<8x18xi32>
    %c1_i32_115 = arith.constant 1 : i32
    %362 = vector.broadcast %c1_i32_115 : i32 to vector<8x18xi32>
    %363 = arith.cmpi eq, %361, %362 : vector<8x18xi32>
    %364 = arith.select %363, %357, %354 : vector<8x18xi1>, vector<8x18xf32>
    %365 = vector.extract_strided_slice %364 {offsets = [0, 8], sizes = [8, 8], strides = [1, 1]} : vector<8x18xf32> to vector<8x8xf32>
    %366 = arith.addf %324, %365 : vector<8x8xf32>
    %cst_116 = arith.constant dense<0xFF800000> : vector<8xf32>
    %367 = vector.multi_reduction <maximumf>, %366, %cst_116 [1] : vector<8x8xf32> to vector<8xf32>
    %368 = vector.shape_cast %367 : vector<8xf32> to vector<8x1xf32>
    %369 = vector.broadcast %368 : vector<8x1xf32> to vector<8x8xf32>
    %370 = arith.subf %366, %369 : vector<8x8xf32>
    %371 = math.exp %370 : vector<8x8xf32>
    %cst_117 = arith.constant dense<0.000000e+00> : vector<8xf32>
    %372 = vector.multi_reduction <add>, %371, %cst_117 [1] : vector<8x8xf32> to vector<8xf32>
    %373 = vector.shape_cast %372 : vector<8xf32> to vector<8x1xf32>
    %374 = tpu.reciprocal %373 {approx = true} : vector<8x1xf32> -> vector<8x1xf32>
    %375 = vector.broadcast %374 : vector<8x1xf32> to vector<8x8xf32>
    %376 = arith.mulf %371, %375 : vector<8x8xf32>
    %377 = arith.truncf %376 : vector<8x8xf32> to vector<8x8xbf16>
    %378 = vector.extract_strided_slice %122 {offsets = [0, 24], sizes = [8, 8], strides = [1, 1]} : vector<8x32xf32> to vector<8x8xf32>
    %379 = arith.truncf %378 : vector<8x8xf32> to vector<8x8xbf16>
    %cst_118 = arith.constant dense<0.000000e+00> : vector<8x8xf32>
    %380 = tpu.matmul %377, %379, %cst_118 {dimension_numbers = #tpu.dot_dimension_numbers<[1], [0], [0], [1], [0, 0, 1, 1], [], []>} : vector<8x8xbf16>, vector<8x8xbf16>, vector<8x8xf32> -> vector<8x8xf32>
    %381 = tpu.concatenate %197, %258, %319, %380 in 1 : vector<8x8xf32>, vector<8x8xf32>, vector<8x8xf32>, vector<8x8xf32> -> vector<8x32xf32>
    %382 = arith.truncf %381 : vector<8x32xf32> to vector<8x32xbf16>
    %c0_119 = arith.constant 0 : index
    %c0_120 = arith.constant 0 : index
    %383 = vector.load %arg9[%c0_119, %c0_120] : memref<32x32xf32, #tpu.memory_space<vmem>>, vector<32x32xf32>
    %384 = arith.truncf %383 : vector<32x32xf32> to vector<32x32xbf16>
    %cst_121 = arith.constant dense<0.000000e+00> : vector<8x32xf32>
    %385 = tpu.matmul %382, %384, %cst_121 {dimension_numbers = #tpu.dot_dimension_numbers<[1], [0], [0], [1], [0, 0, 1, 1], [], []>} : vector<8x32xbf16>, vector<32x32xbf16>, vector<8x32xf32> -> vector<8x32xf32>
    %386 = arith.addf %385, %6 : vector<8x32xf32>
    %c0_122 = arith.constant 0 : index
    %c0_123 = arith.constant 0 : index
    %c0_124 = arith.constant 0 : index
    %387 = vector.load %arg18[%c0_122, %c0_123, %c0_124] : memref<1x8x32xf32, #tpu.memory_space<vmem>>, vector<1x8x32xf32>
    %388 = vector.shape_cast %387 : vector<1x8x32xf32> to vector<8x32xf32>
    %389 = vector.shape_cast %386 : vector<8x32xf32> to vector<1x8x32xf32>
    tpu.vector_store %arg18[%c0_122, %c0_123, %c0_124], %389 {strides = array<i32>} : memref<1x8x32xf32, #tpu.memory_space<vmem>>, vector<1x8x32xf32>,
    return
  }
  func.func @transform_0(%arg0: i32) -> (i32, i32, i32) {
    %c0_i32 = arith.constant 0 : i32
    %c0_i32_0 = arith.constant 0 : i32
    %c0_i32_1 = arith.constant 0 : i32
    %c0_i32_2 = arith.constant 0 : i32
    return %c0_i32, %c0_i32_0, %c0_i32_1 : i32, i32, i32
  }
  func.func @transform_1(%arg0: i32) -> (i32, i32, i32) {
    %c0_i32 = arith.constant 0 : i32
    %c0_i32_0 = arith.constant 0 : i32
    %c0_i32_1 = arith.constant 0 : i32
    %c0_i32_2 = arith.constant 0 : i32
    return %c0_i32, %c0_i32_0, %c0_i32_1 : i32, i32, i32
  }
  func.func @transform_2(%arg0: i32) -> (i32, i32, i32) {
    %c0_i32 = arith.constant 0 : i32
    %c0_i32_0 = arith.constant 0 : i32
    %c0_i32_1 = arith.constant 0 : i32
    %c0_i32_2 = arith.constant 0 : i32
    return %c0_i32, %c0_i32_0, %c0_i32_1 : i32, i32, i32
  }
  func.func @transform_3(%arg0: i32) -> (i32, i32, i32) {
    %c0_i32 = arith.constant 0 : i32
    %c0_i32_0 = arith.constant 0 : i32
    %c0_i32_1 = arith.constant 0 : i32
    %c0_i32_2 = arith.constant 0 : i32
    return %c0_i32, %c0_i32_0, %c0_i32_1 : i32, i32, i32
  }
  func.func @transform_4(%arg0: i32) -> (i32, i32) {
    %c0_i32 = arith.constant 0 : i32
    %c0_i32_0 = arith.constant 0 : i32
    %c0_i32_1 = arith.constant 0 : i32
    return %c0_i32, %c0_i32_0 : i32, i32
  }
  func.func @transform_5(%arg0: i32) -> (i32, i32) {
    %c0_i32 = arith.constant 0 : i32
    %c0_i32_0 = arith.constant 0 : i32
    %c0_i32_1 = arith.constant 0 : i32
    return %c0_i32, %c0_i32_0 : i32, i32
  }
  func.func @transform_6(%arg0: i32) -> (i32, i32) {
    %c0_i32 = arith.constant 0 : i32
    %c0_i32_0 = arith.constant 0 : i32
    %c0_i32_1 = arith.constant 0 : i32
    return %c0_i32, %c0_i32_0 : i32, i32
  }
  func.func @transform_7(%arg0: i32) -> (i32, i32) {
    %c0_i32 = arith.constant 0 : i32
    %c0_i32_0 = arith.constant 0 : i32
    %c0_i32_1 = arith.constant 0 : i32
    return %c0_i32, %c0_i32_0 : i32, i32
  }
  func.func @transform_8(%arg0: i32) -> (i32, i32) {
    %c0_i32 = arith.constant 0 : i32
    %c0_i32_0 = arith.constant 0 : i32
    %c0_i32_1 = arith.constant 0 : i32
    return %c0_i32, %c0_i32_0 : i32, i32
  }
  func.func @transform_9(%arg0: i32) -> (i32, i32) {
    %c0_i32 = arith.constant 0 : i32
    %c0_i32_0 = arith.constant 0 : i32
    %c0_i32_1 = arith.constant 0 : i32
    return %c0_i32, %c0_i32_0 : i32, i32
  }
  func.func @transform_10(%arg0: i32) -> (i32, i32) {
    %c0_i32 = arith.constant 0 : i32
    %c0_i32_0 = arith.constant 0 : i32
    %c0_i32_1 = arith.constant 0 : i32
    return %c0_i32, %c0_i32_0 : i32, i32
  }
  func.func @transform_11(%arg0: i32) -> (i32, i32) {
    %c0_i32 = arith.constant 0 : i32
    %c0_i32_0 = arith.constant 0 : i32
    %c0_i32_1 = arith.constant 0 : i32
    return %c0_i32, %c0_i32_0 : i32, i32
  }
  func.func @transform_12(%arg0: i32) -> (i32, i32) {
    %c0_i32 = arith.constant 0 : i32
    %c0_i32_0 = arith.constant 0 : i32
    %c0_i32_1 = arith.constant 0 : i32
    return %c0_i32, %c0_i32_0 : i32, i32
  }
  func.func @transform_13(%arg0: i32) -> (i32, i32) {
    %c0_i32 = arith.constant 0 : i32
    %c0_i32_0 = arith.constant 0 : i32
    %c0_i32_1 = arith.constant 0 : i32
    return %c0_i32, %c0_i32_0 : i32, i32
  }
  func.func @transform_14(%arg0: i32) -> (i32, i32) {
    %c0_i32 = arith.constant 0 : i32
    %c0_i32_0 = arith.constant 0 : i32
    %c0_i32_1 = arith.constant 0 : i32
    return %c0_i32, %c0_i32_0 : i32, i32
  }
  func.func @transform_15(%arg0: i32) -> (i32, i32) {
    %c0_i32 = arith.constant 0 : i32
    %c0_i32_0 = arith.constant 0 : i32
    %c0_i32_1 = arith.constant 0 : i32
    return %c0_i32, %c0_i32_0 : i32, i32
  }
  func.func @transform_16(%arg0: i32) -> (i32, i32) {
    %c0_i32 = arith.constant 0 : i32
    %c0_i32_0 = arith.constant 0 : i32
    %c0_i32_1 = arith.constant 0 : i32
    return %c0_i32, %c0_i32_0 : i32, i32
  }
  func.func @transform_17(%arg0: i32) -> (i32, i32, i32) {
    %c0_i32 = arith.constant 0 : i32
    %c0_i32_0 = arith.constant 0 : i32
    %c0_i32_1 = arith.constant 0 : i32
    return %c0_i32, %arg0, %c0_i32_0 : i32, i32, i32
  }
}

</mosaic_0001>

<llo_original>
// kernel: tpu_custom_call.1
$region0: #{tpu_custom_call.1}
  #allocation0 [shape = 'u32[]', space=smem, size = 0x4, offset = 0x4, fixed_abs, tag = 'smem constant byte address 0x4 - core index']
  #allocation1 [shape = 'u32[144,128]{1,0:T(1,128)}', space=vmem, size = 0x12000, scoped, tag = 'internal scratch']
  %s0 = inlined_call_operand.hbm [shape: f32[1,8,32], index: 0, kind: input, shape index: {}]
  %s1 = inlined_call_operand.hbm [shape: f32[1,8,32], index: 1, kind: input, shape index: {}]
  %s2 = inlined_call_operand.hbm [shape: f32[1,8,32], index: 2, kind: input, shape index: {}]
  %s3 = inlined_call_operand.hbm [shape: f32[1,8,32], index: 3, kind: input, shape index: {}]
  %s4 = inlined_call_operand.hbm [shape: f32[32,32], index: 4, kind: input, shape index: {}]
  %s5 = inlined_call_operand.hbm [shape: f32[32,32], index: 5, kind: input, shape index: {}]
  %s6 = inlined_call_operand.hbm [shape: f32[32,32], index: 6, kind: input, shape index: {}]
  %s7 = inlined_call_operand.hbm [shape: f32[32,32], index: 7, kind: input, shape index: {}]
  %s8 = inlined_call_operand.hbm [shape: f32[32,32], index: 8, kind: input, shape index: {}]
  %s9 = inlined_call_operand.hbm [shape: f32[1,32], index: 9, kind: input, shape index: {}]
  %s10 = inlined_call_operand.hbm [shape: f32[1,32], index: 10, kind: input, shape index: {}]
  %s11 = inlined_call_operand.hbm [shape: f32[1,32], index: 11, kind: input, shape index: {}]
  %s12 = inlined_call_operand.hbm [shape: f32[1,32], index: 12, kind: input, shape index: {}]
  %s13 = inlined_call_operand.hbm [shape: f32[1,32], index: 13, kind: input, shape index: {}]
  %s14 = inlined_call_operand.hbm [shape: f32[1,32], index: 14, kind: input, shape index: {}]
  %s15 = inlined_call_operand.hbm [shape: f32[1,32], index: 15, kind: input, shape index: {}]
  %s16 = inlined_call_operand.hbm [shape: f32[1,32], index: 16, kind: input, shape index: {}]
  %s17 = inlined_call_operand.hbm [shape: f32[1,8,32], index: 17, kind: output, shape index: {}]
  %s18 = sld [smem:[#allocation0]]
  $region146: #{tpu_custom_call.1} parent=0
    _
  %s20 = ssub.s32 1, %s18
  %s21 = scalar_select 0, %s20, %s18
  $region1: #{tpu_custom_call.1} parent=0
    #allocation2 [shape = 'u8[4096]{0}', space=vmem, size = 0x1000, scoped, tag = 'input window, operand 0, single buffered']
    #allocation3 [shape = 's32[1]{0}', space=sflag, size = 0x4, scoped, tag = 'scoped memory for tpu_custom_call.1']
    #allocation4 [shape = 's32[1]{0}', space=sflag, size = 0x4, scoped, tag = 'scoped memory for tpu_custom_call.1']
    #allocation5 [shape = 'u8[4096]{0}', space=vmem, size = 0x1000, scoped, tag = 'input window, operand 1, single buffered']
    #allocation6 [shape = 's32[1]{0}', space=sflag, size = 0x4, scoped, tag = 'scoped memory for tpu_custom_call.1']
    #allocation7 [shape = 'u8[4096]{0}', space=vmem, size = 0x1000, scoped, tag = 'input window, operand 2, single buffered']
    #allocation8 [shape = 'u8[4096]{0}', space=vmem, size = 0x1000, scoped, tag = 'input window, operand 3, single buffered']
    #allocation9 [shape = 's32[1]{0}', space=sflag, size = 0x4, scoped, tag = 'scoped memory for tpu_custom_call.1']
    #allocation10 [shape = 'u8[16384]{0}', space=vmem, size = 0x4000, scoped, tag = 'input window, operand 4, single buffered']
    #allocation11 [shape = 'u8[16384]{0}', space=vmem, size = 0x4000, scoped, tag = 'input window, operand 5, single buffered']
    #allocation12 [shape = 's32[1]{0}', space=sflag, size = 0x4, scoped, tag = 'scoped memory for tpu_custom_call.1']
    #allocation13 [shape = 'u8[16384]{0}', space=vmem, size = 0x4000, scoped, tag = 'input window, operand 6, single buffered']
    #allocation14 [shape = 'u8[16384]{0}', space=vmem, size = 0x4000, scoped, tag = 'input window, operand 7, single buffered']
    #allocation15 [shape = 's32[1]{0}', space=sflag, size = 0x4, scoped, tag = 'scoped memory for tpu_custom_call.1']
    #allocation16 [shape = 'u8[16384]{0}', space=vmem, size = 0x4000, scoped, tag = 'input window, operand 8, single buffered']
    #allocation17 [shape = 'u8[512]{0}', space=vmem, size = 0x400, scoped, tag = 'input window, operand 9, single buffered']
    #allocation18 [shape = 's32[1]{0}', space=sflag, size = 0x4, scoped, tag = 'scoped memory for tpu_custom_call.1']
    #allocation19 [shape = 'u8[512]{0}', space=vmem, size = 0x400, scoped, tag = 'input window, operand 10, single buffered']
    #allocation20 [shape = 'u8[512]{0}', space=vmem, size = 0x400, scoped, tag = 'input window, operand 11, single buffered']
    #allocation21 [shape = 's32[1]{0}', space=sflag, size = 0x4, scoped, tag = 'scoped memory for tpu_custom_call.1']
    #allocation22 [shape = 'u8[512]{0}', space=vmem, size = 0x400, scoped, tag = 'input window, operand 12, single buffered']
    #allocation23 [shape = 'u8[512]{0}', space=vmem, size = 0x400, scoped, tag = 'input window, operand 13, single buffered']
    #allocation24 [shape = 's32[1]{0}', space=sflag, size = 0x4, scoped, tag = 'scoped memory for tpu_custom_call.1']
    #allocation25 [shape = 'u8[512]{0}', space=vmem, size = 0x400, scoped, tag = 'input window, operand 14, single buffered']
    #allocation26 [shape = 'u8[512]{0}', space=vmem, size = 0x400, scoped, tag = 'input window, operand 15, single buffered']
    #allocation27 [shape = 's32[1]{0}', space=sflag, size = 0x4, scoped, tag = 'scoped memory for tpu_custom_call.1']
    #allocation28 [shape = 'u8[512]{0}', space=vmem, size = 0x400, scoped, tag = 'input window, operand 16, single buffered']
    #allocation29 [shape = 'u8[4096]{0}', space=vmem, size = 0x1000, scoped, tag = 'output window, operand 0, single buffered']
    %22 = vsyncpa [#allocation3], 0
    %23 = vsyncpa [#allocation6], 0
    %24 = vsyncpa [#allocation9], 0
    %25 = vsyncpa [#allocation12], 0
    %26 = vsyncpa [#allocation15], 0
    %27 = vsyncpa [#allocation18], 0
    %28 = vsyncpa [#allocation21], 0
    %29 = vsyncpa [#allocation24], 0
    %30 = vsyncpa [#allocation27], 0
    %31 = vsyncpa [#allocation4], 0
    // Predicated region
    $region2: #{tpu_custom_call.1} parent=1 // pred_check
      _
    $region3: #{tpu_custom_call.1} parent=1 // pred_check_branch
      %33 = sbr.rel (0) target = $region5
    $region4: #{tpu_custom_call.1} parent=1 // pred_region
      %s35 = ssub.s32 128, 128
      %36 = vsyncadd [#allocation3], %s35
      %s38 = sshll.u32 [#allocation2], 4
      %s39 = int_to_ptr.vmem [resolvable:$true] %s38
      %41 = dma.hbm_to_vmem [thread:$0]  %s0, 128, %s39, [#allocation3]
    $region5: #{tpu_custom_call.1} parent=1 // pred_fallthru
      _
    // Predicated region
    $region6: #{tpu_custom_call.1} parent=1 // pred_check
      _
    $region7: #{tpu_custom_call.1} parent=1 // pred_check_branch
      %43 = sbr.rel (0) target = $region9
    $region8: #{tpu_custom_call.1} parent=1 // pred_region
      %s45 = ssub.s32 128, 128
      %46 = vsyncadd [#allocation6], %s45
      %s48 = sshll.u32 [#allocation5], 4
      %s49 = int_to_ptr.vmem [resolvable:$true] %s48
      %51 = dma.hbm_to_vmem [thread:$0]  %s1, 128, %s49, [#allocation6]
    $region9: #{tpu_custom_call.1} parent=1 // pred_fallthru
      _
    // Predicated region
    $region10: #{tpu_custom_call.1} parent=1 // pred_check
      _
    $region11: #{tpu_custom_call.1} parent=1 // pred_check_branch
      %53 = sbr.rel (0) target = $region13
    $region12: #{tpu_custom_call.1} parent=1 // pred_region
      %s55 = ssub.s32 128, 128
      %56 = vsyncadd [#allocation6], %s55
      %s58 = sshll.u32 [#allocation7], 4
      %s59 = int_to_ptr.vmem [resolvable:$true] %s58
      %61 = dma.hbm_to_vmem [thread:$0]  %s2, 128, %s59, [#allocation6]
    $region13: #{tpu_custom_call.1} parent=1 // pred_fallthru
      _
    // Predicated region
    $region14: #{tpu_custom_call.1} parent=1 // pred_check
      _
    $region15: #{tpu_custom_call.1} parent=1 // pred_check_branch
      %63 = sbr.rel (0) target = $region17
    $region16: #{tpu_custom_call.1} parent=1 // pred_region
      %s65 = ssub.s32 128, 128
      %66 = vsyncadd [#allocation9], %s65
      %s68 = sshll.u32 [#allocation8], 4
      %s69 = int_to_ptr.vmem [resolvable:$true] %s68
      %71 = dma.hbm_to_vmem [thread:$0]  %s3, 128, %s69, [#allocation9]
    $region17: #{tpu_custom_call.1} parent=1 // pred_fallthru
      _
    // Predicated region
    $region18: #{tpu_custom_call.1} parent=1 // pred_check
      _
    $region19: #{tpu_custom_call.1} parent=1 // pred_check_branch
      %73 = sbr.rel (0) target = $region21
    $region20: #{tpu_custom_call.1} parent=1 // pred_region
      %s75 = ssub.s32 512, 512
      %76 = vsyncadd [#allocation9], %s75
      %s77 = sshll.u32 [#allocation10], 4
      %s78 = int_to_ptr.vmem [resolvable:$true] %s77
      %83 = dma.hbm_to_vmem [thread:$0]  %s4, 512, %s78, [#allocation9], 128, 128, 8
    $region21: #{tpu_custom_call.1} parent=1 // pred_fallthru
      _
    // Predicated region
    $region22: #{tpu_custom_call.1} parent=1 // pred_check
      _
    $region23: #{tpu_custom_call.1} parent=1 // pred_check_branch
      %85 = sbr.rel (0) target = $region25
    $region24: #{tpu_custom_call.1} parent=1 // pred_region
      %s87 = ssub.s32 512, 512
      %88 = vsyncadd [#allocation12], %s87
      %s89 = sshll.u32 [#allocation11], 4
      %s90 = int_to_ptr.vmem [resolvable:$true] %s89
      %95 = dma.hbm_to_vmem [thread:$0]  %s5, 512, %s90, [#allocation12], 128, 128, 8
    $region25: #{tpu_custom_call.1} parent=1 // pred_fallthru
      _
    // Predicated region
    $region26: #{tpu_custom_call.1} parent=1 // pred_check
      _
    $region27: #{tpu_custom_call.1} parent=1 // pred_check_branch
      %97 = sbr.rel (0) target = $region29
    $region28: #{tpu_custom_call.1} parent=1 // pred_region
      %s99 = ssub.s32 512, 512
      %100 = vsyncadd [#allocation12], %s99
      %s101 = sshll.u32 [#allocation13], 4
      %s102 = int_to_ptr.vmem [resolvable:$true] %s101
      %107 = dma.hbm_to_vmem [thread:$0]  %s6, 512, %s102, [#allocation12], 128, 128, 8
    $region29: #{tpu_custom_call.1} parent=1 // pred_fallthru
      _
    // Predicated region
    $region30: #{tpu_custom_call.1} parent=1 // pred_check
      _
    $region31: #{tpu_custom_call.1} parent=1 // pred_check_branch
      %109 = sbr.rel (0) target = $region33
    $region32: #{tpu_custom_call.1} parent=1 // pred_region
      %s111 = ssub.s32 512, 512
      %112 = vsyncadd [#allocation15], %s111
      %s113 = sshll.u32 [#allocation14], 4
      %s114 = int_to_ptr.vmem [resolvable:$true] %s113
      %119 = dma.hbm_to_vmem [thread:$0]  %s7, 512, %s114, [#allocation15], 128, 128, 8
    $region33: #{tpu_custom_call.1} parent=1 // pred_fallthru
      _
    // Predicated region
    $region34: #{tpu_custom_call.1} parent=1 // pred_check
      _
    $region35: #{tpu_custom_call.1} parent=1 // pred_check_branch
      %121 = sbr.rel (0) target = $region37
    $region36: #{tpu_custom_call.1} parent=1 // pred_region
      %s123 = ssub.s32 512, 512
      %124 = vsyncadd [#allocation15], %s123
      %s125 = sshll.u32 [#allocation16], 4
      %s126 = int_to_ptr.vmem [resolvable:$true] %s125
      %131 = dma.hbm_to_vmem [thread:$0]  %s8, 512, %s126, [#allocation15], 128, 128, 8
    $region37: #{tpu_custom_call.1} parent=1 // pred_fallthru
      _
    // Predicated region
    $region38: #{tpu_custom_call.1} parent=1 // pred_check
      _
    $region39: #{tpu_custom_call.1} parent=1 // pred_check_branch
      %133 = sbr.rel (0) target = $region41
    $region40: #{tpu_custom_call.1} parent=1 // pred_region
      %s135 = ssub.s32 16, 16
      %136 = vsyncadd [#allocation18], %s135
      %s138 = sshll.u32 [#allocation17], 4
      %s139 = int_to_ptr.vmem [resolvable:$true] %s138
      %141 = dma.hbm_to_vmem [thread:$0]  %s9, 16, %s139, [#allocation18]
    $region41: #{tpu_custom_call.1} parent=1 // pred_fallthru
      _
    // Predicated region
    $region42: #{tpu_custom_call.1} parent=1 // pred_check
      _
    $region43: #{tpu_custom_call.1} parent=1 // pred_check_branch
      %143 = sbr.rel (0) target = $region45
    $region44: #{tpu_custom_call.1} parent=1 // pred_region
      %s145 = ssub.s32 16, 16
      %146 = vsyncadd [#allocation18], %s145
      %s148 = sshll.u32 [#allocation19], 4
      %s149 = int_to_ptr.vmem [resolvable:$true] %s148
      %151 = dma.hbm_to_vmem [thread:$0]  %s10, 16, %s149, [#allocation18]
    $region45: #{tpu_custom_call.1} parent=1 // pred_fallthru
      _
    // Predicated region
    $region46: #{tpu_custom_call.1} parent=1 // pred_check
      _
    $region47: #{tpu_custom_call.1} parent=1 // pred_check_branch
      %153 = sbr.rel (0) target = $region49
    $region48: #{tpu_custom_call.1} parent=1 // pred_region
      %s155 = ssub.s32 16, 16
      %156 = vsyncadd [#allocation21], %s155
      %s158 = sshll.u32 [#allocation20], 4
      %s159 = int_to_ptr.vmem [resolvable:$true] %s158
      %161 = dma.hbm_to_vmem [thread:$0]  %s11, 16, %s159, [#allocation21]
    $region49: #{tpu_custom_call.1} parent=1 // pred_fallthru
      _
    // Predicated region
    $region50: #{tpu_custom_call.1} parent=1 // pred_check
      _
    $region51: #{tpu_custom_call.1} parent=1 // pred_check_branch
      %163 = sbr.rel (0) target = $region53
    $region52: #{tpu_custom_call.1} parent=1 // pred_region
      %s165 = ssub.s32 16, 16
      %166 = vsyncadd [#allocation21], %s165
      %s168 = sshll.u32 [#allocation22], 4
      %s169 = int_to_ptr.vmem [resolvable:$true] %s168
      %171 = dma.hbm_to_vmem [thread:$0]  %s12, 16, %s169, [#allocation21]
    $region53: #{tpu_custom_call.1} parent=1 // pred_fallthru
      _
    // Predicated region
    $region54: #{tpu_custom_call.1} parent=1 // pred_check
      _
    $region55: #{tpu_custom_call.1} parent=1 // pred_check_branch
      %173 = sbr.rel (0) target = $region57
    $region56: #{tpu_custom_call.1} parent=1 // pred_region
      %s175 = ssub.s32 16, 16
      %176 = vsyncadd [#allocation24], %s175
      %s178 = sshll.u32 [#allocation23], 4
      %s179 = int_to_ptr.vmem [resolvable:$true] %s178
      %181 = dma.hbm_to_vmem [thread:$0]  %s13, 16, %s179, [#allocation24]
    $region57: #{tpu_custom_call.1} parent=1 // pred_fallthru
      _
    // Predicated region
    $region58: #{tpu_custom_call.1} parent=1 // pred_check
      _
    $region59: #{tpu_custom_call.1} parent=1 // pred_check_branch
      %183 = sbr.rel (0) target = $region61
    $region60: #{tpu_custom_call.1} parent=1 // pred_region
      %s185 = ssub.s32 16, 16
      %186 = vsyncadd [#allocation24], %s185
      %s188 = sshll.u32 [#allocation25], 4
      %s189 = int_to_ptr.vmem [resolvable:$true] %s188
      %191 = dma.hbm_to_vmem [thread:$0]  %s14, 16, %s189, [#allocation24]
    $region61: #{tpu_custom_call.1} parent=1 // pred_fallthru
      _
    // Predicated region
    $region62: #{tpu_custom_call.1} parent=1 // pred_check
      _
    $region63: #{tpu_custom_call.1} parent=1 // pred_check_branch
      %193 = sbr.rel (0) target = $region65
    $region64: #{tpu_custom_call.1} parent=1 // pred_region
      %s195 = ssub.s32 16, 16
      %196 = vsyncadd [#allocation27], %s195
      %s198 = sshll.u32 [#allocation26], 4
      %s199 = int_to_ptr.vmem [resolvable:$true] %s198
      %201 = dma.hbm_to_vmem [thread:$0]  %s15, 16, %s199, [#allocation27]
    $region65: #{tpu_custom_call.1} parent=1 // pred_fallthru
      _
    // Predicated region
    $region66: #{tpu_custom_call.1} parent=1 // pred_check
      _
    $region67: #{tpu_custom_call.1} parent=1 // pred_check_branch
      %203 = sbr.rel (0) target = $region69
    $region68: #{tpu_custom_call.1} parent=1 // pred_region
      %s205 = ssub.s32 16, 16
      %206 = vsyncadd [#allocation27], %s205
      %s208 = sshll.u32 [#allocation28], 4
      %s209 = int_to_ptr.vmem [resolvable:$true] %s208
      %211 = dma.hbm_to_vmem [thread:$0]  %s16, 16, %s209, [#allocation27]
    $region69: #{tpu_custom_call.1} parent=1 // pred_fallthru
      _
    // Predicated region
    $region70: #{tpu_custom_call.1} parent=1 // pred_check
      _
    $region71: #{tpu_custom_call.1} parent=1 // pred_check_branch
      %213 = sbr.rel (0) target = $region73
    $region72: #{tpu_custom_call.1} parent=1 // pred_region
      %214 = dma.done [#allocation3], 128
    $region73: #{tpu_custom_call.1} parent=1 // pred_fallthru
      _
    // Predicated region
    $region74: #{tpu_custom_call.1} parent=1 // pred_check
      _
    $region75: #{tpu_custom_call.1} parent=1 // pred_check_branch
      %216 = sbr.rel (0) target = $region77
    $region76: #{tpu_custom_call.1} parent=1 // pred_region
      %217 = dma.done [#allocation6], 128
    $region77: #{tpu_custom_call.1} parent=1 // pred_fallthru
      _
    // Predicated region
    $region78: #{tpu_custom_call.1} parent=1 // pred_check
      _
    $region79: #{tpu_custom_call.1} parent=1 // pred_check_branch
      %219 = sbr.rel (0) target = $region81
    $region80: #{tpu_custom_call.1} parent=1 // pred_region
      %220 = dma.done [#allocation6], 128
    $region81: #{tpu_custom_call.1} parent=1 // pred_fallthru
      _
    // Predicated region
    $region82: #{tpu_custom_call.1} parent=1 // pred_check
      _
    $region83: #{tpu_custom_call.1} parent=1 // pred_check_branch
      %222 = sbr.rel (0) target = $region85
    $region84: #{tpu_custom_call.1} parent=1 // pred_region
      %223 = dma.done [#allocation9], 128
    $region85: #{tpu_custom_call.1} parent=1 // pred_fallthru
      _
    // Predicated region
    $region86: #{tpu_custom_call.1} parent=1 // pred_check
      _
    $region87: #{tpu_custom_call.1} parent=1 // pred_check_branch
      %225 = sbr.rel (0) target = $region89
    $region88: #{tpu_custom_call.1} parent=1 // pred_region
      %226 = dma.done [#allocation9], 512
    $region89: #{tpu_custom_call.1} parent=1 // pred_fallthru
      _
    // Predicated region
    $region90: #{tpu_custom_call.1} parent=1 // pred_check
      _
    $region91: #{tpu_custom_call.1} parent=1 // pred_check_branch
      %228 = sbr.rel (0) target = $region93
    $region92: #{tpu_custom_call.1} parent=1 // pred_region
      %229 = dma.done [#allocation12], 512
    $region93: #{tpu_custom_call.1} parent=1 // pred_fallthru
      _
    // Predicated region
    $region94: #{tpu_custom_call.1} parent=1 // pred_check
      _
    $region95: #{tpu_custom_call.1} parent=1 // pred_check_branch
      %231 = sbr.rel (0) target = $region97
    $region96: #{tpu_custom_call.1} parent=1 // pred_region
      %232 = dma.done [#allocation12], 512
    $region97: #{tpu_custom_call.1} parent=1 // pred_fallthru
      _
    // Predicated region
    $region98: #{tpu_custom_call.1} parent=1 // pred_check
      _
    $region99: #{tpu_custom_call.1} parent=1 // pred_check_branch
      %234 = sbr.rel (0) target = $region101
    $region100: #{tpu_custom_call.1} parent=1 // pred_region
      %235 = dma.done [#allocation15], 512
    $region101: #{tpu_custom_call.1} parent=1 // pred_fallthru
      _
    // Predicated region
    $region102: #{tpu_custom_call.1} parent=1 // pred_check
      _
    $region103: #{tpu_custom_call.1} parent=1 // pred_check_branch
      %237 = sbr.rel (0) target = $region105
    $region104: #{tpu_custom_call.1} parent=1 // pred_region
      %238 = dma.done [#allocation15], 512
    $region105: #{tpu_custom_call.1} parent=1 // pred_fallthru
      _
    // Predicated region
    $region106: #{tpu_custom_call.1} parent=1 // pred_check
      _
    $region107: #{tpu_custom_call.1} parent=1 // pred_check_branch
      %240 = sbr.rel (0) target = $region109
    $region108: #{tpu_custom_call.1} parent=1 // pred_region
      %241 = dma.done [#allocation18], 16
    $region109: #{tpu_custom_call.1} parent=1 // pred_fallthru
      _
    // Predicated region
    $region110: #{tpu_custom_call.1} parent=1 // pred_check
      _
    $region111: #{tpu_custom_call.1} parent=1 // pred_check_branch
      %243 = sbr.rel (0) target = $region113
    $region112: #{tpu_custom_call.1} parent=1 // pred_region
      %244 = dma.done [#allocation18], 16
    $region113: #{tpu_custom_call.1} parent=1 // pred_fallthru
      _
    // Predicated region
    $region114: #{tpu_custom_call.1} parent=1 // pred_check
      _
    $region115: #{tpu_custom_call.1} parent=1 // pred_check_branch
      %246 = sbr.rel (0) target = $region117
    $region116: #{tpu_custom_call.1} parent=1 // pred_region
      %247 = dma.done [#allocation21], 16
    $region117: #{tpu_custom_call.1} parent=1 // pred_fallthru
      _
    // Predicated region
    $region118: #{tpu_custom_call.1} parent=1 // pred_check
      _
    $region119: #{tpu_custom_call.1} parent=1 // pred_check_branch
      %249 = sbr.rel (0) target = $region121
    $region120: #{tpu_custom_call.1} parent=1 // pred_region
      %250 = dma.done [#allocation21], 16
    $region121: #{tpu_custom_call.1} parent=1 // pred_fallthru
      _
    // Predicated region
    $region122: #{tpu_custom_call.1} parent=1 // pred_check
      _
    $region123: #{tpu_custom_call.1} parent=1 // pred_check_branch
      %252 = sbr.rel (0) target = $region125
    $region124: #{tpu_custom_call.1} parent=1 // pred_region
      %253 = dma.done [#allocation24], 16
    $region125: #{tpu_custom_call.1} parent=1 // pred_fallthru
      _
    // Predicated region
    $region126: #{tpu_custom_call.1} parent=1 // pred_check
      _
    $region127: #{tpu_custom_call.1} parent=1 // pred_check_branch
      %255 = sbr.rel (0) target = $region129
    $region128: #{tpu_custom_call.1} parent=1 // pred_region
      %256 = dma.done [#allocation24], 16
    $region129: #{tpu_custom_call.1} parent=1 // pred_fallthru
      _
    // Predicated region
    $region130: #{tpu_custom_call.1} parent=1 // pred_check
      _
    $region131: #{tpu_custom_call.1} parent=1 // pred_check_branch
      %258 = sbr.rel (0) target = $region133
    $region132: #{tpu_custom_call.1} parent=1 // pred_region
      %259 = dma.done [#allocation27], 16
    $region133: #{tpu_custom_call.1} parent=1 // pred_fallthru
      _
    // Predicated region
    $region134: #{tpu_custom_call.1} parent=1 // pred_check
      _
    $region135: #{tpu_custom_call.1} parent=1 // pred_check_branch
      %261 = sbr.rel (0) target = $region137
    $region136: #{tpu_custom_call.1} parent=1 // pred_region
      %262 = dma.done [#allocation27], 16
    $region137: #{tpu_custom_call.1} parent=1 // pred_fallthru
      _
    %s264 = smul.u32 0, 8
    %v265 = vld [vmem:[#allocation20] sm:$0x1]
    %v266 = vld [vmem:[#allocation22] sm:$0x1]
    %s267 = scalar_lea.vmem [#allocation2], %s264
    %v268 = vld [vmem:[%s267] sm:$0xff]
    %vm269 = vcmask 261120
    %v270 = vsel %vm269, %v268, 0.0
    %271 = vadd.xlane.f32.xlu0 %v270
    %v272 = vpop.xlane.xlu0 %271
    %v273 = vrcp.pop 32.0
    %v274 = vmul.f32 %v272, %v273
    %v275 = vsub.f32 %v268, %v274
    %v276 = vmul.f32 %v275, %v275
    %v277 = vsel %vm269, %v276, 0.0
    %278 = vadd.xlane.f32.xlu0 %v277
    %v279 = vpop.xlane.xlu0 %278
    %v280 = vmul.f32 %v279, %v273
    %v281 = vadd.f32 %v280, 1e-05
    %v282 = vrsqrt.pop %v281
    %v283 = vmul.f32 %v275, %v282
    %v285 = vlaneseq
    %v286 = vshrl.u32 %v285, 7
    %v287 = vsub.s32 0, %v286
    %v288 = vrot.slane %v265, %v287
    %v290 = vmul.f32 %v283, %v288
    %v292 = vlaneseq
    %v293 = vshrl.u32 %v292, 7
    %v294 = vsub.s32 0, %v293
    %v295 = vrot.slane %v266, %v294
    %v297 = vadd.f32 %v290, %v295
    %v298 = vld [vmem:[#allocation5] sm:$0xff]
    %v299 = vld [vmem:[#allocation23] sm:$0x1]
    %v300 = vld [vmem:[#allocation25] sm:$0x1]
    %v301 = vsel %vm269, %v298, 0.0
    %302 = vadd.xlane.f32.xlu0 %v301
    %v303 = vpop.xlane.xlu0 %302
    %v304 = vmul.f32 %v303, %v273
    %v305 = vsub.f32 %v298, %v304
    %v306 = vmul.f32 %v305, %v305
    %v307 = vsel %vm269, %v306, 0.0
    %308 = vadd.xlane.f32.xlu0 %v307
    %v309 = vpop.xlane.xlu0 %308
    %v310 = vmul.f32 %v309, %v273
    %v311 = vadd.f32 %v310, 1e-05
    %v312 = vrsqrt.pop %v311
    %v313 = vmul.f32 %v305, %v312
    %v315 = vlaneseq
    %v316 = vshrl.u32 %v315, 7
    %v317 = vsub.s32 0, %v316
    %v318 = vrot.slane %v299, %v317
    %v320 = vmul.f32 %v313, %v318
    %v322 = vlaneseq
    %v323 = vshrl.u32 %v322, 7
    %v324 = vsub.s32 0, %v323
    %v325 = vrot.slane %v300, %v324
    %v327 = vadd.f32 %v320, %v325
    %v328 = vld [vmem:[#allocation7] sm:$0xff]
    %v329 = vld [vmem:[#allocation26] sm:$0x1]
    %v330 = vld [vmem:[#allocation28] sm:$0x1]
    %v331 = vsel %vm269, %v328, 0.0
    %332 = vadd.xlane.f32.xlu0 %v331
    %v333 = vpop.xlane.xlu0 %332
    %v334 = vmul.f32 %v333, %v273
    %v335 = vsub.f32 %v328, %v334
    %v336 = vmul.f32 %v335, %v335
    %v337 = vsel %vm269, %v336, 0.0
    %338 = vadd.xlane.f32.xlu0 %v337
    %v339 = vpop.xlane.xlu0 %338
    %v340 = vmul.f32 %v339, %v273
    %v341 = vadd.f32 %v340, 1e-05
    %v342 = vrsqrt.pop %v341
    %v343 = vmul.f32 %v335, %v342
    %v345 = vlaneseq
    %v346 = vshrl.u32 %v345, 7
    %v347 = vsub.s32 0, %v346
    %v348 = vrot.slane %v329, %v347
    %v350 = vmul.f32 %v343, %v348
    %v352 = vlaneseq
    %v353 = vshrl.u32 %v352, 7
    %v354 = vsub.s32 0, %v353
    %v355 = vrot.slane %v330, %v354
    %v357 = vadd.f32 %v350, %v355
    %v358 = vld [vmem:[#allocation8] sm:$0xff]
    %s359 = sadd.s32 %s264, 8
    %p360 = scmp.lt.s32.totalorder %s359, 0
    %s361 = scalar_select %p360, %s359, 0
    %s362 = scalar_lea.vmem [#allocation2], %s361
    %v363 = vld [vmem:[%s362] sm:$0x1]
    %vm364 = vcmask 253952
    %v365 = vsel %vm364, %v363, 0.0
    %366 = vadd.xlane.f32.xlu0 %v365
    %v367 = vpop.xlane.xlu0 %366
    %v368 = vmul.f32 %v367, %v273
    %v369 = vsub.f32 %v363, %v368
    %v370 = vmul.f32 %v369, %v369
    %v371 = vsel %vm364, %v370, 0.0
    %372 = vadd.xlane.f32.xlu0 %v371
    %v373 = vpop.xlane.xlu0 %372
    %v374 = vmul.f32 %v373, %v273
    %v375 = vadd.f32 %v374, 1e-05
    %v376 = vrsqrt.pop %v375
    %v377 = vmul.f32 %v369, %v376
    %v378 = vmul.f32 %v377, %v265
    %v379 = vadd.f32 %v378, %v266
    %v380 = vld [vmem:[#allocation10] sm:$0xff]
    %v381 = vld [vmem:[#allocation10 + $0x8] sm:$0xff]
    %v382 = vld [vmem:[#allocation10 + $0x10] sm:$0xff]
    %v383 = vld [vmem:[#allocation10 + $0x18] sm:$0xff]
    %v384 = vpack.c.bf16 %v381, %v380
    %v385 = vpack.c.bf16 %v383, %v382
    %v386 = vpack.c.bf16 %v297, %v297
    %v388 = vsel %vm269, %v386, 0
    %390 = vmatprep.subr.bf16.mxu0 0
    %391 = vmatpush1.bf16.msra.mxu0 %v384
    %392 = vmatprep.subr.bf16.mxu0 0
    %393 = vmatpush1.bf16.msra.mxu0 %v385
    %394 = vmatprep.subr.bf16.mxu0 0
    %395 = vmatpush1.bf16.msra.mxu0 0
    %396 = vmatprep.subr.bf16.mxu0 0
    %397 = vmatpush1.bf16.msra.mxu0 0
    %398 = vmatprep.subr.bf16.mxu0 0
    %399 = vmatpush1.bf16.msra.mxu0 0
    %400 = vmatprep.subr.bf16.mxu0 0
    %401 = vmatpush1.bf16.msra.mxu0 0
    %402 = vmatprep.subr.bf16.mxu0 0
    %403 = vmatpush1.bf16.msra.mxu0 0
    %404 = vmatprep.subr.bf16.mxu0 0
    %405 = vmatpush1.bf16.msra.mxu0 0
    %406 = vmatprep.subr.bf16.mxu0 0
    %407 = vmatpush1.bf16.msra.mxu0 0
    %408 = vmatprep.subr.bf16.mxu0 0
    %409 = vmatpush1.bf16.msra.mxu0 0
    %410 = vmatprep.subr.bf16.mxu0 0
    %411 = vmatpush1.bf16.msra.mxu0 0
    %412 = vmatprep.subr.bf16.mxu0 0
    %413 = vmatpush1.bf16.msra.mxu0 0
    %414 = vmatprep.subr.bf16.mxu0 0
    %415 = vmatpush1.bf16.msra.mxu0 0
    %416 = vmatprep.subr.bf16.mxu0 0
    %417 = vmatpush1.bf16.msra.mxu0 0
    %418 = vmatprep.subr.bf16.mxu0 0
    %419 = vmatpush1.bf16.msra.mxu0 0
    %420 = vmatprep.subr.bf16.mxu0 0
    %421 = vmatpush1.bf16.msra.mxu0 0
    %422 = vmatprep.mubr.bf16.mxu0 0
    %423 = vmatmul.mubr.bf16.gmra.mrb[0].mxu0 %v388
    %v424 = vpop.f32.mrb[0].mxu0
    %v425 = vadd.f32 0.0, %v424
    %v426 = vpop.f32.mrb[0].mxu0
    %v427 = vpop.f32.mrb[0].mxu0
    %v428 = vpop.f32.mrb[0].mxu0
    %429 = vdwg.mxu0
    %v430 = vpack.c.bf16 %v379, %v379
    %v432 = vsel %vm269, %v430, 0
    %434 = vmatprep.subr.bf16.mxu0 0
    %435 = vmatpush1.bf16.msra.mxu0 %v384
    %436 = vmatprep.subr.bf16.mxu0 0
    %437 = vmatpush1.bf16.msra.mxu0 %v385
    %438 = vmatprep.subr.bf16.mxu0 0
    %439 = vmatpush1.bf16.msra.mxu0 0
    %440 = vmatprep.subr.bf16.mxu0 0
    %441 = vmatpush1.bf16.msra.mxu0 0
    %442 = vmatprep.subr.bf16.mxu0 0
    %443 = vmatpush1.bf16.msra.mxu0 0
    %444 = vmatprep.subr.bf16.mxu0 0
    %445 = vmatpush1.bf16.msra.mxu0 0
    %446 = vmatprep.subr.bf16.mxu0 0
    %447 = vmatpush1.bf16.msra.mxu0 0
    %448 = vmatprep.subr.bf16.mxu0 0
    %449 = vmatpush1.bf16.msra.mxu0 0
    %450 = vmatprep.subr.bf16.mxu0 0
    %451 = vmatpush1.bf16.msra.mxu0 0
    %452 = vmatprep.subr.bf16.mxu0 0
    %453 = vmatpush1.bf16.msra.mxu0 0
    %454 = vmatprep.subr.bf16.mxu0 0
    %455 = vmatpush1.bf16.msra.mxu0 0
    %456 = vmatprep.subr.bf16.mxu0 0
    %457 = vmatpush1.bf16.msra.mxu0 0
    %458 = vmatprep.subr.bf16.mxu0 0
    %459 = vmatpush1.bf16.msra.mxu0 0
    %460 = vmatprep.subr.bf16.mxu0 0
    %461 = vmatpush1.bf16.msra.mxu0 0
    %462 = vmatprep.subr.bf16.mxu0 0
    %463 = vmatpush1.bf16.msra.mxu0 0
    %464 = vmatprep.subr.bf16.mxu0 0
    %465 = vmatpush1.bf16.msra.mxu0 0
    %466 = vmatprep.mubr.bf16.mxu0 0
    %467 = vmatmul.mubr.bf16.gmra.mrb[0].mxu0 %v432
    %v468 = vpop.f32.mrb[0].mxu0
    %v469 = vadd.f32 0.0, %v468
    %v470 = vpop.f32.mrb[0].mxu0
    %v471 = vpop.f32.mrb[0].mxu0
    %v472 = vpop.f32.mrb[0].mxu0
    %473 = vdwg.mxu0
    %v474 = vpack.c.bf16 %v327, %v327
    %v475 = vld [vmem:[#allocation11] sm:$0xff]
    %v476 = vld [vmem:[#allocation11 + $0x8] sm:$0xff]
    %v477 = vld [vmem:[#allocation11 + $0x10] sm:$0xff]
    %v478 = vld [vmem:[#allocation11 + $0x18] sm:$0xff]
    %v479 = vpack.c.bf16 %v476, %v475
    %v480 = vpack.c.bf16 %v478, %v477
    %v482 = vsel %vm269, %v474, 0
    %484 = vmatprep.subr.bf16.mxu0 0
    %485 = vmatpush1.bf16.msra.mxu0 %v479
    %486 = vmatprep.subr.bf16.mxu0 0
    %487 = vmatpush1.bf16.msra.mxu0 %v480
    %488 = vmatprep.subr.bf16.mxu0 0
    %489 = vmatpush1.bf16.msra.mxu0 0
    %490 = vmatprep.subr.bf16.mxu0 0
    %491 = vmatpush1.bf16.msra.mxu0 0
    %492 = vmatprep.subr.bf16.mxu0 0
    %493 = vmatpush1.bf16.msra.mxu0 0
    %494 = vmatprep.subr.bf16.mxu0 0
    %495 = vmatpush1.bf16.msra.mxu0 0
    %496 = vmatprep.subr.bf16.mxu0 0
    %497 = vmatpush1.bf16.msra.mxu0 0
    %498 = vmatprep.subr.bf16.mxu0 0
    %499 = vmatpush1.bf16.msra.mxu0 0
    %500 = vmatprep.subr.bf16.mxu0 0
    %501 = vmatpush1.bf16.msra.mxu0 0
    %502 = vmatprep.subr.bf16.mxu0 0
    %503 = vmatpush1.bf16.msra.mxu0 0
    %504 = vmatprep.subr.bf16.mxu0 0
    %505 = vmatpush1.bf16.msra.mxu0 0
    %506 = vmatprep.subr.bf16.mxu0 0
    %507 = vmatpush1.bf16.msra.mxu0 0
    %508 = vmatprep.subr.bf16.mxu0 0
    %509 = vmatpush1.bf16.msra.mxu0 0
    %510 = vmatprep.subr.bf16.mxu0 0
    %511 = vmatpush1.bf16.msra.mxu0 0
    %512 = vmatprep.subr.bf16.mxu0 0
    %513 = vmatpush1.bf16.msra.mxu0 0
    %514 = vmatprep.subr.bf16.mxu0 0
    %515 = vmatpush1.bf16.msra.mxu0 0
    %516 = vmatprep.mubr.bf16.mxu0 0
    %517 = vmatmul.mubr.bf16.gmra.mrb[0].mxu0 %v482
    %v518 = vpop.f32.mrb[0].mxu0
    %v519 = vadd.f32 0.0, %v518
    %v520 = vpop.f32.mrb[0].mxu0
    %v521 = vpop.f32.mrb[0].mxu0
    %v522 = vpop.f32.mrb[0].mxu0
    %523 = vdwg.mxu0
    %v524 = vpack.c.bf16 %v357, %v357
    %v525 = vld [vmem:[#allocation13] sm:$0xff]
    %v526 = vld [vmem:[#allocation13 + $0x8] sm:$0xff]
    %v527 = vld [vmem:[#allocation13 + $0x10] sm:$0xff]
    %v528 = vld [vmem:[#allocation13 + $0x18] sm:$0xff]
    %v529 = vpack.c.bf16 %v526, %v525
    %v530 = vpack.c.bf16 %v528, %v527
    %v532 = vsel %vm269, %v524, 0
    %534 = vmatprep.subr.bf16.mxu0 0
    %535 = vmatpush1.bf16.msra.mxu0 %v529
    %536 = vmatprep.subr.bf16.mxu0 0
    %537 = vmatpush1.bf16.msra.mxu0 %v530
    %538 = vmatprep.subr.bf16.mxu0 0
    %539 = vmatpush1.bf16.msra.mxu0 0
    %540 = vmatprep.subr.bf16.mxu0 0
    %541 = vmatpush1.bf16.msra.mxu0 0
    %542 = vmatprep.subr.bf16.mxu0 0
    %543 = vmatpush1.bf16.msra.mxu0 0
    %544 = vmatprep.subr.bf16.mxu0 0
    %545 = vmatpush1.bf16.msra.mxu0 0
    %546 = vmatprep.subr.bf16.mxu0 0
    %547 = vmatpush1.bf16.msra.mxu0 0
    %548 = vmatprep.subr.bf16.mxu0 0
    %549 = vmatpush1.bf16.msra.mxu0 0
    %550 = vmatprep.subr.bf16.mxu0 0
    %551 = vmatpush1.bf16.msra.mxu0 0
    %552 = vmatprep.subr.bf16.mxu0 0
    %553 = vmatpush1.bf16.msra.mxu0 0
    %554 = vmatprep.subr.bf16.mxu0 0
    %555 = vmatpush1.bf16.msra.mxu0 0
    %556 = vmatprep.subr.bf16.mxu0 0
    %557 = vmatpush1.bf16.msra.mxu0 0
    %558 = vmatprep.subr.bf16.mxu0 0
    %559 = vmatpush1.bf16.msra.mxu0 0
    %560 = vmatprep.subr.bf16.mxu0 0
    %561 = vmatpush1.bf16.msra.mxu0 0
    %562 = vmatprep.subr.bf16.mxu0 0
    %563 = vmatpush1.bf16.msra.mxu0 0
    %564 = vmatprep.subr.bf16.mxu0 0
    %565 = vmatpush1.bf16.msra.mxu0 0
    %566 = vmatprep.mubr.bf16.mxu0 0
    %567 = vmatmul.mubr.bf16.gmra.mrb[0].mxu0 %v532
    %v568 = vpop.f32.mrb[0].mxu0
    %v569 = vadd.f32 0.0, %v568
    %v570 = vpop.f32.mrb[0].mxu0
    %v571 = vpop.f32.mrb[0].mxu0
    %v572 = vpop.f32.mrb[0].mxu0
    %573 = vdwg.mxu0
    %v574 = vpack.c.bf16 %v358, %v358
    %v575 = vld [vmem:[#allocation14] sm:$0xff]
    %v576 = vld [vmem:[#allocation14 + $0x8] sm:$0xff]
    %v577 = vld [vmem:[#allocation14 + $0x10] sm:$0xff]
    %v578 = vld [vmem:[#allocation14 + $0x18] sm:$0xff]
    %v579 = vpack.c.bf16 %v576, %v575
    %v580 = vpack.c.bf16 %v578, %v577
    %v582 = vsel %vm269, %v574, 0
    %584 = vmatprep.subr.bf16.mxu0 0
    %585 = vmatpush1.bf16.msra.mxu0 %v579
    %586 = vmatprep.subr.bf16.mxu0 0
    %587 = vmatpush1.bf16.msra.mxu0 %v580
    %588 = vmatprep.subr.bf16.mxu0 0
    %589 = vmatpush1.bf16.msra.mxu0 0
    %590 = vmatprep.subr.bf16.mxu0 0
    %591 = vmatpush1.bf16.msra.mxu0 0
    %592 = vmatprep.subr.bf16.mxu0 0
    %593 = vmatpush1.bf16.msra.mxu0 0
    %594 = vmatprep.subr.bf16.mxu0 0
    %595 = vmatpush1.bf16.msra.mxu0 0
    %596 = vmatprep.subr.bf16.mxu0 0
    %597 = vmatpush1.bf16.msra.mxu0 0
    %598 = vmatprep.subr.bf16.mxu0 0
    %599 = vmatpush1.bf16.msra.mxu0 0
    %600 = vmatprep.subr.bf16.mxu0 0
    %601 = vmatpush1.bf16.msra.mxu0 0
    %602 = vmatprep.subr.bf16.mxu0 0
    %603 = vmatpush1.bf16.msra.mxu0 0
    %604 = vmatprep.subr.bf16.mxu0 0
    %605 = vmatpush1.bf16.msra.mxu0 0
    %606 = vmatprep.subr.bf16.mxu0 0
    %607 = vmatpush1.bf16.msra.mxu0 0
    %608 = vmatprep.subr.bf16.mxu0 0
    %609 = vmatpush1.bf16.msra.mxu0 0
    %610 = vmatprep.subr.bf16.mxu0 0
    %611 = vmatpush1.bf16.msra.mxu0 0
    %612 = vmatprep.subr.bf16.mxu0 0
    %613 = vmatpush1.bf16.msra.mxu0 0
    %614 = vmatprep.subr.bf16.mxu0 0
    %615 = vmatpush1.bf16.msra.mxu0 0
    %616 = vmatprep.mubr.bf16.mxu0 0
    %617 = vmatmul.mubr.bf16.gmra.mrb[0].mxu0 %v582
    %v618 = vpop.f32.mrb[0].mxu0
    %v619 = vadd.f32 0.0, %v618
    %v620 = vpop.f32.mrb[0].mxu0
    %v621 = vpop.f32.mrb[0].mxu0
    %v622 = vpop.f32.mrb[0].mxu0
    %623 = vdwg.mxu0
    %v624 = vld [vmem:[#allocation17] sm:$0x1]
    %v626 = vlaneseq
    %v627 = vshrl.u32 %v626, 7
    %v628 = vsub.s32 0, %v627
    %v629 = vrot.slane %v624, %v628
    %v631 = vadd.f32 %v425, %v629
    %v632 = vld [vmem:[#allocation19] sm:$0x1]
    %v634 = vlaneseq
    %v635 = vshrl.u32 %v634, 7
    %v636 = vsub.s32 0, %v635
    %v637 = vrot.slane %v632, %v636
    %v639 = vadd.f32 %v425, %v637
    %v640 = vadd.f32 %v469, %v637
    %v641 = vlaneseq
    %v642 = vshrl.u32 %v641, 7
    %v643 = vstv %s264
    %v644 = vadd.s32 %v643, %v642
    %v645 = vpack.c.bf16 %v631, %v631
    %v646 = vpack.c.bf16 %v519, %v519
    %v647 = vpack.c.bf16 %v640, %v639
    %v648 = vpack.c.bf16 %v619, %v619
    %vm649 = vcmask 64512
    %v651 = vsel %vm649, %v647, 0
    %v654 = vsel %vm649, %v648, 0
    %656 = vmatprep.subr.bf16.mxu0 0
    %657 = vmatpush1.bf16.xpose.msra.mxu0 %v654
    %658 = vmatprep.subr.bf16.mxu0 0
    %659 = vmatpush1.bf16.xpose.msra.mxu0 0
    %660 = vmatprep.subr.bf16.mxu0 0
    %661 = vmatpush1.bf16.xpose.msra.mxu0 0
    %662 = vmatprep.subr.bf16.mxu0 0
    %663 = vmatpush1.bf16.xpose.msra.mxu0 0
    %664 = vmatprep.subr.bf16.mxu0 0
    %665 = vmatpush1.bf16.xpose.msra.mxu0 0
    %666 = vmatprep.subr.bf16.mxu0 0
    %667 = vmatpush1.bf16.xpose.msra.mxu0 0
    %668 = vmatprep.subr.bf16.mxu0 0
    %669 = vmatpush1.bf16.xpose.msra.mxu0 0
    %670 = vmatprep.subr.bf16.mxu0 0
    %671 = vmatpush1.bf16.xpose.msra.mxu0 0
    %672 = vmatprep.subr.bf16.mxu0 0
    %673 = vmatpush1.bf16.xpose.msra.mxu0 0
    %674 = vmatprep.subr.bf16.mxu0 0
    %675 = vmatpush1.bf16.xpose.msra.mxu0 0
    %676 = vmatprep.subr.bf16.mxu0 0
    %677 = vmatpush1.bf16.xpose.msra.mxu0 0
    %678 = vmatprep.subr.bf16.mxu0 0
    %679 = vmatpush1.bf16.xpose.msra.mxu0 0
    %680 = vmatprep.subr.bf16.mxu0 0
    %681 = vmatpush1.bf16.xpose.msra.mxu0 0
    %682 = vmatprep.subr.bf16.mxu0 0
    %683 = vmatpush1.bf16.xpose.msra.mxu0 0
    %684 = vmatprep.subr.bf16.mxu0 0
    %685 = vmatpush1.bf16.xpose.msra.mxu0 0
    %686 = vmatprep.subr.bf16.mxu0 0
    %687 = vmatpush1.bf16.xpose.msra.mxu0 0
    %688 = vmatprep.mubr.bf16.mxu0 0
    %689 = vmatmul.mubr.bf16.gmra.mrb[0].mxu0 %v651
    %v690 = vpop.f32.mrb[0].mxu0
    %v691 = vadd.f32 0.0, %v690
    %v692 = vpop.f32.mrb[0].mxu0
    %v693 = vpop.f32.mrb[0].mxu0
    %v694 = vadd.f32 0.0, %v693
    %v695 = vpop.f32.mrb[0].mxu0
    %696 = vdwg.mxu0
    %699 = vrot.lane.b32.xlu0 %v691, 1
    %v700 = vpop.permute.xlu0 %699
    %701 = vrot.lane.b32.xlu0 %v694, 1
    %v702 = vpop.permute.xlu0 %701
    %vm705 = vcmask 7168
    %v706 = vsel %vm705, 0.0, %v700
    %v707 = vsel %vm705, 0.0, %v702
    %vm710 = vcmask 1046528
    %v711 = vrot.slane %v706, 1
    %v712 = vrot.slane %v707, 1
    %v713 = vsel %vm710, %v711, %v712
    %714 = vrot.lane.b32.xlu0 %v713, 9
    %v715 = vpop.permute.xlu0 %714
    %vm717 = vcmask 72704
    %v718 = vsel %vm717, %v706, %v715
    %720 = vrot.lane.b32.xlu0 %v718, 111
    %v721 = vpop.permute.xlu0 %720
    %723 = vrot.lane.b32.xlu0 %v718, 1
    %v724 = vpop.permute.xlu0 %723
    %v726 = vsel %vm705, %v721, %v724
    %v727 = vand.u32 %v644, 1
    %vm728 = vcmp.eq.s32.totalorder %v727, 1
    %v729 = vsel %vm728, %v726, %v718
    %731 = vrot.lane.b32.xlu0 %v729, 112
    %v732 = vpop.permute.xlu0 %731
    %734 = vrot.lane.b32.xlu0 %v729, 2
    %v735 = vpop.permute.xlu0 %734
    %vm737 = vcmask 15360
    %v738 = vsel %vm737, %v732, %v735
    %v739 = vshra.s32 %v644, 1
    %v740 = vand.u32 %v739, 1
    %vm741 = vcmp.eq.s32.totalorder %v740, 1
    %v742 = vsel %vm741, %v738, %v729
    %744 = vrot.lane.b32.xlu0 %v742, 114
    %v745 = vpop.permute.xlu0 %744
    %747 = vrot.lane.b32.xlu0 %v742, 4
    %v748 = vpop.permute.xlu0 %747
    %vm750 = vcmask 31744
    %v751 = vsel %vm750, %v745, %v748
    %v752 = vshra.s32 %v644, 2
    %v753 = vand.u32 %v752, 1
    %vm754 = vcmp.eq.s32.totalorder %v753, 1
    %v755 = vsel %vm754, %v751, %v742
    %757 = vrot.lane.b32.xlu0 %v755, 120
    %v758 = vpop.permute.xlu0 %757
    %v761 = vsel %vm649, %v645, 0
    %v764 = vsel %vm649, %v646, 0
    %766 = vmatprep.subr.bf16.mxu0 0
    %767 = vmatpush1.bf16.xpose.msra.mxu0 %v764
    %768 = vmatprep.subr.bf16.mxu0 0
    %769 = vmatpush1.bf16.xpose.msra.mxu0 0
    %770 = vmatprep.subr.bf16.mxu0 0
    %771 = vmatpush1.bf16.xpose.msra.mxu0 0
    %772 = vmatprep.subr.bf16.mxu0 0
    %773 = vmatpush1.bf16.xpose.msra.mxu0 0
    %774 = vmatprep.subr.bf16.mxu0 0
    %775 = vmatpush1.bf16.xpose.msra.mxu0 0
    %776 = vmatprep.subr.bf16.mxu0 0
    %777 = vmatpush1.bf16.xpose.msra.mxu0 0
    %778 = vmatprep.subr.bf16.mxu0 0
    %779 = vmatpush1.bf16.xpose.msra.mxu0 0
    %780 = vmatprep.subr.bf16.mxu0 0
    %781 = vmatpush1.bf16.xpose.msra.mxu0 0
    %782 = vmatprep.subr.bf16.mxu0 0
    %783 = vmatpush1.bf16.xpose.msra.mxu0 0
    %784 = vmatprep.subr.bf16.mxu0 0
    %785 = vmatpush1.bf16.xpose.msra.mxu0 0
    %786 = vmatprep.subr.bf16.mxu0 0
    %787 = vmatpush1.bf16.xpose.msra.mxu0 0
    %788 = vmatprep.subr.bf16.mxu0 0
    %789 = vmatpush1.bf16.xpose.msra.mxu0 0
    %790 = vmatprep.subr.bf16.mxu0 0
    %791 = vmatpush1.bf16.xpose.msra.mxu0 0
    %792 = vmatprep.subr.bf16.mxu0 0
    %793 = vmatpush1.bf16.xpose.msra.mxu0 0
    %794 = vmatprep.subr.bf16.mxu0 0
    %795 = vmatpush1.bf16.xpose.msra.mxu0 0
    %796 = vmatprep.subr.bf16.mxu0 0
    %797 = vmatpush1.bf16.xpose.msra.mxu0 0
    %798 = vmatprep.mubr.bf16.mxu0 0
    %799 = vmatmul.mubr.bf16.gmra.mrb[0].mxu0 %v761
    %v800 = vpop.f32.mrb[0].mxu0
    %v801 = vadd.f32 %v758, %v800
    %v802 = vpop.f32.mrb[0].mxu0
    %v803 = vpop.f32.mrb[0].mxu0
    %v804 = vpop.f32.mrb[0].mxu0
    %805 = vdwg.mxu0
    %v806 = vsel %vm649, %v801, -inf
    %807 = vmax.xlane.f32.xlu0 %v806
    %v808 = vpop.xlane.xlu0 %807
    %v809 = vsub.f32 %v801, %v808
    %v810 = vmul.f32 %v809, 1.442695
    %v811 = vpow.pop %v810
    %v812 = vsel %vm649, %v811, 0.0
    %813 = vadd.xlane.f32.xlu0 %v812
    %v814 = vpop.xlane.xlu0 %813
    %v815 = vrcp.pop %v814
    %v816 = vmul.f32 %v811, %v815
    %v817 = vpack.c.bf16 %v816, %v816
    %v818 = vpack.c.bf16 %v569, %v569
    %v820 = vsel %vm649, %v817, 0
    %vm822 = vcmask 1043456
    %v824 = vsel %vm822, %v818, 0
    %826 = vmatprep.subr.bf16.mxu0 0
    %827 = vmatpush1.bf16.msra.mxu0 %v824
    %828 = vmatprep.subr.bf16.mxu0 0
    %829 = vmatpush1.bf16.msra.mxu0 0
    %830 = vmatprep.subr.bf16.mxu0 0
    %831 = vmatpush1.bf16.msra.mxu0 0
    %832 = vmatprep.subr.bf16.mxu0 0
    %833 = vmatpush1.bf16.msra.mxu0 0
    %834 = vmatprep.subr.bf16.mxu0 0
    %835 = vmatpush1.bf16.msra.mxu0 0
    %836 = vmatprep.subr.bf16.mxu0 0
    %837 = vmatpush1.bf16.msra.mxu0 0
    %838 = vmatprep.subr.bf16.mxu0 0
    %839 = vmatpush1.bf16.msra.mxu0 0
    %840 = vmatprep.subr.bf16.mxu0 0
    %841 = vmatpush1.bf16.msra.mxu0 0
    %842 = vmatprep.subr.bf16.mxu0 0
    %843 = vmatpush1.bf16.msra.mxu0 0
    %844 = vmatprep.subr.bf16.mxu0 0
    %845 = vmatpush1.bf16.msra.mxu0 0
    %846 = vmatprep.subr.bf16.mxu0 0
    %847 = vmatpush1.bf16.msra.mxu0 0
    %848 = vmatprep.subr.bf16.mxu0 0
    %849 = vmatpush1.bf16.msra.mxu0 0
    %850 = vmatprep.subr.bf16.mxu0 0
    %851 = vmatpush1.bf16.msra.mxu0 0
    %852 = vmatprep.subr.bf16.mxu0 0
    %853 = vmatpush1.bf16.msra.mxu0 0
    %854 = vmatprep.subr.bf16.mxu0 0
    %855 = vmatpush1.bf16.msra.mxu0 0
    %856 = vmatprep.subr.bf16.mxu0 0
    %857 = vmatpush1.bf16.msra.mxu0 0
    %858 = vmatprep.mubr.bf16.mxu0 0
    %859 = vmatmul.mubr.bf16.gmra.mrb[0].mxu0 %v820
    %v860 = vpop.f32.mrb[0].mxu0
    %v861 = vadd.f32 0.0, %v860
    %v862 = vpop.f32.mrb[0].mxu0
    %v863 = vpop.f32.mrb[0].mxu0
    %v864 = vpop.f32.mrb[0].mxu0
    %865 = vdwg.mxu0
    %867 = vrot.lane.b32.xlu0 %v647, 120
    %v868 = vpop.permute.xlu0 %867
    %870 = vrot.lane.b32.xlu0 %v648, 120
    %v871 = vpop.permute.xlu0 %870
    %v873 = vsel %vm649, %v868, 0
    %v876 = vsel %vm649, %v871, 0
    %878 = vmatprep.subr.bf16.mxu0 0
    %879 = vmatpush1.bf16.xpose.msra.mxu0 %v876
    %880 = vmatprep.subr.bf16.mxu0 0
    %881 = vmatpush1.bf16.xpose.msra.mxu0 0
    %882 = vmatprep.subr.bf16.mxu0 0
    %883 = vmatpush1.bf16.xpose.msra.mxu0 0
    %884 = vmatprep.subr.bf16.mxu0 0
    %885 = vmatpush1.bf16.xpose.msra.mxu0 0
    %886 = vmatprep.subr.bf16.mxu0 0
    %887 = vmatpush1.bf16.xpose.msra.mxu0 0
    %888 = vmatprep.subr.bf16.mxu0 0
    %889 = vmatpush1.bf16.xpose.msra.mxu0 0
    %890 = vmatprep.subr.bf16.mxu0 0
    %891 = vmatpush1.bf16.xpose.msra.mxu0 0
    %892 = vmatprep.subr.bf16.mxu0 0
    %893 = vmatpush1.bf16.xpose.msra.mxu0 0
    %894 = vmatprep.subr.bf16.mxu0 0
    %895 = vmatpush1.bf16.xpose.msra.mxu0 0
    %896 = vmatprep.subr.bf16.mxu0 0
    %897 = vmatpush1.bf16.xpose.msra.mxu0 0
    %898 = vmatprep.subr.bf16.mxu0 0
    %899 = vmatpush1.bf16.xpose.msra.mxu0 0
    %900 = vmatprep.subr.bf16.mxu0 0
    %901 = vmatpush1.bf16.xpose.msra.mxu0 0
    %902 = vmatprep.subr.bf16.mxu0 0
    %903 = vmatpush1.bf16.xpose.msra.mxu0 0
    %904 = vmatprep.subr.bf16.mxu0 0
    %905 = vmatpush1.bf16.xpose.msra.mxu0 0
    %906 = vmatprep.subr.bf16.mxu0 0
    %907 = vmatpush1.bf16.xpose.msra.mxu0 0
    %908 = vmatprep.subr.bf16.mxu0 0
    %909 = vmatpush1.bf16.xpose.msra.mxu0 0
    %910 = vmatprep.mubr.bf16.mxu0 0
    %911 = vmatmul.mubr.bf16.gmra.mrb[0].mxu0 %v873
    %v912 = vpop.f32.mrb[0].mxu0
    %v913 = vadd.f32 0.0, %v912
    %v914 = vpop.f32.mrb[0].mxu0
    %v915 = vpop.f32.mrb[0].mxu0
    %v916 = vadd.f32 0.0, %v915
    %v917 = vpop.f32.mrb[0].mxu0
    %918 = vdwg.mxu0
    %921 = vrot.lane.b32.xlu0 %v913, 1
    %v922 = vpop.permute.xlu0 %921
    %923 = vrot.lane.b32.xlu0 %v916, 1
    %v924 = vpop.permute.xlu0 %923
    %v927 = vsel %vm705, 0.0, %v922
    %v928 = vsel %vm705, 0.0, %v924
    %v931 = vrot.slane %v927, 1
    %v932 = vrot.slane %v928, 1
    %v933 = vsel %vm710, %v931, %v932
    %934 = vrot.lane.b32.xlu0 %v933, 9
    %v935 = vpop.permute.xlu0 %934
    %v937 = vsel %vm717, %v927, %v935
    %939 = vrot.lane.b32.xlu0 %v937, 111
    %v940 = vpop.permute.xlu0 %939
    %942 = vrot.lane.b32.xlu0 %v937, 1
    %v943 = vpop.permute.xlu0 %942
    %v945 = vsel %vm705, %v940, %v943
    %v946 = vsel %vm728, %v945, %v937
    %948 = vrot.lane.b32.xlu0 %v946, 112
    %v949 = vpop.permute.xlu0 %948
    %951 = vrot.lane.b32.xlu0 %v946, 2
    %v952 = vpop.permute.xlu0 %951
    %v954 = vsel %vm737, %v949, %v952
    %v955 = vsel %vm741, %v954, %v946
    %957 = vrot.lane.b32.xlu0 %v955, 114
    %v958 = vpop.permute.xlu0 %957
    %960 = vrot.lane.b32.xlu0 %v955, 4
    %v961 = vpop.permute.xlu0 %960
    %v963 = vsel %vm750, %v958, %v961
    %v964 = vsel %vm754, %v963, %v955
    %966 = vrot.lane.b32.xlu0 %v645, 120
    %v967 = vpop.permute.xlu0 %966
    %969 = vrot.lane.b32.xlu0 %v646, 120
    %v970 = vpop.permute.xlu0 %969
    %972 = vrot.lane.b32.xlu0 %v964, 120
    %v973 = vpop.permute.xlu0 %972
    %v976 = vsel %vm649, %v967, 0
    %v979 = vsel %vm649, %v970, 0
    %981 = vmatprep.subr.bf16.mxu0 0
    %982 = vmatpush1.bf16.xpose.msra.mxu0 %v979
    %983 = vmatprep.subr.bf16.mxu0 0
    %984 = vmatpush1.bf16.xpose.msra.mxu0 0
    %985 = vmatprep.subr.bf16.mxu0 0
    %986 = vmatpush1.bf16.xpose.msra.mxu0 0
    %987 = vmatprep.subr.bf16.mxu0 0
    %988 = vmatpush1.bf16.xpose.msra.mxu0 0
    %989 = vmatprep.subr.bf16.mxu0 0
    %990 = vmatpush1.bf16.xpose.msra.mxu0 0
    %991 = vmatprep.subr.bf16.mxu0 0
    %992 = vmatpush1.bf16.xpose.msra.mxu0 0
    %993 = vmatprep.subr.bf16.mxu0 0
    %994 = vmatpush1.bf16.xpose.msra.mxu0 0
    %995 = vmatprep.subr.bf16.mxu0 0
    %996 = vmatpush1.bf16.xpose.msra.mxu0 0
    %997 = vmatprep.subr.bf16.mxu0 0
    %998 = vmatpush1.bf16.xpose.msra.mxu0 0
    %999 = vmatprep.subr.bf16.mxu0 0
    %1000 = vmatpush1.bf16.xpose.msra.mxu0 0
    %1001 = vmatprep.subr.bf16.mxu0 0
    %1002 = vmatpush1.bf16.xpose.msra.mxu0 0
    %1003 = vmatprep.subr.bf16.mxu0 0
    %1004 = vmatpush1.bf16.xpose.msra.mxu0 0
    %1005 = vmatprep.subr.bf16.mxu0 0
    %1006 = vmatpush1.bf16.xpose.msra.mxu0 0
    %1007 = vmatprep.subr.bf16.mxu0 0
    %1008 = vmatpush1.bf16.xpose.msra.mxu0 0
    %1009 = vmatprep.subr.bf16.mxu0 0
    %1010 = vmatpush1.bf16.xpose.msra.mxu0 0
    %1011 = vmatprep.subr.bf16.mxu0 0
    %1012 = vmatpush1.bf16.xpose.msra.mxu0 0
    %1013 = vmatprep.mubr.bf16.mxu0 0
    %1014 = vmatmul.mubr.bf16.gmra.mrb[0].mxu0 %v976
    %v1015 = vpop.f32.mrb[0].mxu0
    %v1016 = vadd.f32 %v973, %v1015
    %v1017 = vpop.f32.mrb[0].mxu0
    %v1018 = vpop.f32.mrb[0].mxu0
    %v1019 = vpop.f32.mrb[0].mxu0
    %1020 = vdwg.mxu0
    %v1021 = vsel %vm649, %v1016, -inf
    %1022 = vmax.xlane.f32.xlu0 %v1021
    %v1023 = vpop.xlane.xlu0 %1022
    %v1024 = vsub.f32 %v1016, %v1023
    %v1025 = vmul.f32 %v1024, 1.442695
    %v1026 = vpow.pop %v1025
    %v1027 = vsel %vm649, %v1026, 0.0
    %1028 = vadd.xlane.f32.xlu0 %v1027
    %v1029 = vpop.xlane.xlu0 %1028
    %v1030 = vrcp.pop %v1029
    %v1031 = vmul.f32 %v1026, %v1030
    %v1032 = vpack.c.bf16 %v1031, %v1031
    %1034 = vrot.lane.b32.xlu0 %v818, 120
    %v1035 = vpop.permute.xlu0 %1034
    %v1037 = vsel %vm649, %v1032, 0
    %v1040 = vsel %vm822, %v1035, 0
    %1042 = vmatprep.subr.bf16.mxu0 0
    %1043 = vmatpush1.bf16.msra.mxu0 %v1040
    %1044 = vmatprep.subr.bf16.mxu0 0
    %1045 = vmatpush1.bf16.msra.mxu0 0
    %1046 = vmatprep.subr.bf16.mxu0 0
    %1047 = vmatpush1.bf16.msra.mxu0 0
    %1048 = vmatprep.subr.bf16.mxu0 0
    %1049 = vmatpush1.bf16.msra.mxu0 0
    %1050 = vmatprep.subr.bf16.mxu0 0
    %1051 = vmatpush1.bf16.msra.mxu0 0
    %1052 = vmatprep.subr.bf16.mxu0 0
    %1053 = vmatpush1.bf16.msra.mxu0 0
    %1054 = vmatprep.subr.bf16.mxu0 0
    %1055 = vmatpush1.bf16.msra.mxu0 0
    %1056 = vmatprep.subr.bf16.mxu0 0
    %1057 = vmatpush1.bf16.msra.mxu0 0
    %1058 = vmatprep.subr.bf16.mxu0 0
    %1059 = vmatpush1.bf16.msra.mxu0 0
    %1060 = vmatprep.subr.bf16.mxu0 0
    %1061 = vmatpush1.bf16.msra.mxu0 0
    %1062 = vmatprep.subr.bf16.mxu0 0
    %1063 = vmatpush1.bf16.msra.mxu0 0
    %1064 = vmatprep.subr.bf16.mxu0 0
    %1065 = vmatpush1.bf16.msra.mxu0 0
    %1066 = vmatprep.subr.bf16.mxu0 0
    %1067 = vmatpush1.bf16.msra.mxu0 0
    %1068 = vmatprep.subr.bf16.mxu0 0
    %1069 = vmatpush1.bf16.msra.mxu0 0
    %1070 = vmatprep.subr.bf16.mxu0 0
    %1071 = vmatpush1.bf16.msra.mxu0 0
    %1072 = vmatprep.subr.bf16.mxu0 0
    %1073 = vmatpush1.bf16.msra.mxu0 0
    %1074 = vmatprep.mubr.bf16.mxu0 0
    %1075 = vmatmul.mubr.bf16.gmra.mrb[0].mxu0 %v1037
    %v1076 = vpop.f32.mrb[0].mxu0
    %v1077 = vadd.f32 0.0, %v1076
    %v1078 = vpop.f32.mrb[0].mxu0
    %v1079 = vpop.f32.mrb[0].mxu0
    %v1080 = vpop.f32.mrb[0].mxu0
    %1081 = vdwg.mxu0
    %1082 = vrot.lane.b32.xlu0 %v647, 112
    %v1083 = vpop.permute.xlu0 %1082
    %1084 = vrot.lane.b32.xlu0 %v648, 112
    %v1085 = vpop.permute.xlu0 %1084
    %v1087 = vsel %vm649, %v1083, 0
    %v1090 = vsel %vm649, %v1085, 0
    %1092 = vmatprep.subr.bf16.mxu0 0
    %1093 = vmatpush1.bf16.xpose.msra.mxu0 %v1090
    %1094 = vmatprep.subr.bf16.mxu0 0
    %1095 = vmatpush1.bf16.xpose.msra.mxu0 0
    %1096 = vmatprep.subr.bf16.mxu0 0
    %1097 = vmatpush1.bf16.xpose.msra.mxu0 0
    %1098 = vmatprep.subr.bf16.mxu0 0
    %1099 = vmatpush1.bf16.xpose.msra.mxu0 0
    %1100 = vmatprep.subr.bf16.mxu0 0
    %1101 = vmatpush1.bf16.xpose.msra.mxu0 0
    %1102 = vmatprep.subr.bf16.mxu0 0
    %1103 = vmatpush1.bf16.xpose.msra.mxu0 0
    %1104 = vmatprep.subr.bf16.mxu0 0
    %1105 = vmatpush1.bf16.xpose.msra.mxu0 0
    %1106 = vmatprep.subr.bf16.mxu0 0
    %1107 = vmatpush1.bf16.xpose.msra.mxu0 0
    %1108 = vmatprep.subr.bf16.mxu0 0
    %1109 = vmatpush1.bf16.xpose.msra.mxu0 0
    %1110 = vmatprep.subr.bf16.mxu0 0
    %1111 = vmatpush1.bf16.xpose.msra.mxu0 0
    %1112 = vmatprep.subr.bf16.mxu0 0
    %1113 = vmatpush1.bf16.xpose.msra.mxu0 0
    %1114 = vmatprep.subr.bf16.mxu0 0
    %1115 = vmatpush1.bf16.xpose.msra.mxu0 0
    %1116 = vmatprep.subr.bf16.mxu0 0
    %1117 = vmatpush1.bf16.xpose.msra.mxu0 0
    %1118 = vmatprep.subr.bf16.mxu0 0
    %1119 = vmatpush1.bf16.xpose.msra.mxu0 0
    %1120 = vmatprep.subr.bf16.mxu0 0
    %1121 = vmatpush1.bf16.xpose.msra.mxu0 0
    %1122 = vmatprep.subr.bf16.mxu0 0
    %1123 = vmatpush1.bf16.xpose.msra.mxu0 0
    %1124 = vmatprep.mubr.bf16.mxu0 0
    %1125 = vmatmul.mubr.bf16.gmra.mrb[0].mxu0 %v1087
    %v1126 = vpop.f32.mrb[0].mxu0
    %v1127 = vadd.f32 0.0, %v1126
    %v1128 = vpop.f32.mrb[0].mxu0
    %v1129 = vpop.f32.mrb[0].mxu0
    %v1130 = vadd.f32 0.0, %v1129
    %v1131 = vpop.f32.mrb[0].mxu0
    %1132 = vdwg.mxu0
    %1135 = vrot.lane.b32.xlu0 %v1127, 1
    %v1136 = vpop.permute.xlu0 %1135
    %1137 = vrot.lane.b32.xlu0 %v1130, 1
    %v1138 = vpop.permute.xlu0 %1137
    %v1141 = vsel %vm705, 0.0, %v1136
    %v1142 = vsel %vm705, 0.0, %v1138
    %v1145 = vrot.slane %v1141, 1
    %v1146 = vrot.slane %v1142, 1
    %v1147 = vsel %vm710, %v1145, %v1146
    %1148 = vrot.lane.b32.xlu0 %v1147, 9
    %v1149 = vpop.permute.xlu0 %1148
    %v1151 = vsel %vm717, %v1141, %v1149
    %1153 = vrot.lane.b32.xlu0 %v1151, 111
    %v1154 = vpop.permute.xlu0 %1153
    %1156 = vrot.lane.b32.xlu0 %v1151, 1
    %v1157 = vpop.permute.xlu0 %1156
    %v1159 = vsel %vm705, %v1154, %v1157
    %v1160 = vsel %vm728, %v1159, %v1151
    %1162 = vrot.lane.b32.xlu0 %v1160, 112
    %v1163 = vpop.permute.xlu0 %1162
    %1165 = vrot.lane.b32.xlu0 %v1160, 2
    %v1166 = vpop.permute.xlu0 %1165
    %v1168 = vsel %vm737, %v1163, %v1166
    %v1169 = vsel %vm741, %v1168, %v1160
    %1171 = vrot.lane.b32.xlu0 %v1169, 114
    %v1172 = vpop.permute.xlu0 %1171
    %1174 = vrot.lane.b32.xlu0 %v1169, 4
    %v1175 = vpop.permute.xlu0 %1174
    %v1177 = vsel %vm750, %v1172, %v1175
    %v1178 = vsel %vm754, %v1177, %v1169
    %1179 = vrot.lane.b32.xlu0 %v645, 112
    %v1180 = vpop.permute.xlu0 %1179
    %1181 = vrot.lane.b32.xlu0 %v646, 112
    %v1182 = vpop.permute.xlu0 %1181
    %1184 = vrot.lane.b32.xlu0 %v1178, 120
    %v1185 = vpop.permute.xlu0 %1184
    %v1188 = vsel %vm649, %v1180, 0
    %v1191 = vsel %vm649, %v1182, 0
    %1193 = vmatprep.subr.bf16.mxu0 0
    %1194 = vmatpush1.bf16.xpose.msra.mxu0 %v1191
    %1195 = vmatprep.subr.bf16.mxu0 0
    %1196 = vmatpush1.bf16.xpose.msra.mxu0 0
    %1197 = vmatprep.subr.bf16.mxu0 0
    %1198 = vmatpush1.bf16.xpose.msra.mxu0 0
    %1199 = vmatprep.subr.bf16.mxu0 0
    %1200 = vmatpush1.bf16.xpose.msra.mxu0 0
    %1201 = vmatprep.subr.bf16.mxu0 0
    %1202 = vmatpush1.bf16.xpose.msra.mxu0 0
    %1203 = vmatprep.subr.bf16.mxu0 0
    %1204 = vmatpush1.bf16.xpose.msra.mxu0 0
    %1205 = vmatprep.subr.bf16.mxu0 0
    %1206 = vmatpush1.bf16.xpose.msra.mxu0 0
    %1207 = vmatprep.subr.bf16.mxu0 0
    %1208 = vmatpush1.bf16.xpose.msra.mxu0 0
    %1209 = vmatprep.subr.bf16.mxu0 0
    %1210 = vmatpush1.bf16.xpose.msra.mxu0 0
    %1211 = vmatprep.subr.bf16.mxu0 0
    %1212 = vmatpush1.bf16.xpose.msra.mxu0 0
    %1213 = vmatprep.subr.bf16.mxu0 0
    %1214 = vmatpush1.bf16.xpose.msra.mxu0 0
    %1215 = vmatprep.subr.bf16.mxu0 0
    %1216 = vmatpush1.bf16.xpose.msra.mxu0 0
    %1217 = vmatprep.subr.bf16.mxu0 0
    %1218 = vmatpush1.bf16.xpose.msra.mxu0 0
    %1219 = vmatprep.subr.bf16.mxu0 0
    %1220 = vmatpush1.bf16.xpose.msra.mxu0 0
    %1221 = vmatprep.subr.bf16.mxu0 0
    %1222 = vmatpush1.bf16.xpose.msra.mxu0 0
    %1223 = vmatprep.subr.bf16.mxu0 0
    %1224 = vmatpush1.bf16.xpose.msra.mxu0 0
    %1225 = vmatprep.mubr.bf16.mxu0 0
    %1226 = vmatmul.mubr.bf16.gmra.mrb[0].mxu0 %v1188
    %v1227 = vpop.f32.mrb[0].mxu0
    %v1228 = vadd.f32 %v1185, %v1227
    %v1229 = vpop.f32.mrb[0].mxu0
    %v1230 = vpop.f32.mrb[0].mxu0
    %v1231 = vpop.f32.mrb[0].mxu0
    %1232 = vdwg.mxu0
    %v1233 = vsel %vm649, %v1228, -inf
    %1234 = vmax.xlane.f32.xlu0 %v1233
    %v1235 = vpop.xlane.xlu0 %1234
    %v1236 = vsub.f32 %v1228, %v1235
    %v1237 = vmul.f32 %v1236, 1.442695
    %v1238 = vpow.pop %v1237
    %v1239 = vsel %vm649, %v1238, 0.0
    %1240 = vadd.xlane.f32.xlu0 %v1239
    %v1241 = vpop.xlane.xlu0 %1240
    %v1242 = vrcp.pop %v1241
    %v1243 = vmul.f32 %v1238, %v1242
    %v1244 = vpack.c.bf16 %v1243, %v1243
    %1245 = vrot.lane.b32.xlu0 %v818, 112
    %v1246 = vpop.permute.xlu0 %1245
    %v1248 = vsel %vm649, %v1244, 0
    %v1251 = vsel %vm822, %v1246, 0
    %1253 = vmatprep.subr.bf16.mxu0 0
    %1254 = vmatpush1.bf16.msra.mxu0 %v1251
    %1255 = vmatprep.subr.bf16.mxu0 0
    %1256 = vmatpush1.bf16.msra.mxu0 0
    %1257 = vmatprep.subr.bf16.mxu0 0
    %1258 = vmatpush1.bf16.msra.mxu0 0
    %1259 = vmatprep.subr.bf16.mxu0 0
    %1260 = vmatpush1.bf16.msra.mxu0 0
    %1261 = vmatprep.subr.bf16.mxu0 0
    %1262 = vmatpush1.bf16.msra.mxu0 0
    %1263 = vmatprep.subr.bf16.mxu0 0
    %1264 = vmatpush1.bf16.msra.mxu0 0
    %1265 = vmatprep.subr.bf16.mxu0 0
    %1266 = vmatpush1.bf16.msra.mxu0 0
    %1267 = vmatprep.subr.bf16.mxu0 0
    %1268 = vmatpush1.bf16.msra.mxu0 0
    %1269 = vmatprep.subr.bf16.mxu0 0
    %1270 = vmatpush1.bf16.msra.mxu0 0
    %1271 = vmatprep.subr.bf16.mxu0 0
    %1272 = vmatpush1.bf16.msra.mxu0 0
    %1273 = vmatprep.subr.bf16.mxu0 0
    %1274 = vmatpush1.bf16.msra.mxu0 0
    %1275 = vmatprep.subr.bf16.mxu0 0
    %1276 = vmatpush1.bf16.msra.mxu0 0
    %1277 = vmatprep.subr.bf16.mxu0 0
    %1278 = vmatpush1.bf16.msra.mxu0 0
    %1279 = vmatprep.subr.bf16.mxu0 0
    %1280 = vmatpush1.bf16.msra.mxu0 0
    %1281 = vmatprep.subr.bf16.mxu0 0
    %1282 = vmatpush1.bf16.msra.mxu0 0
    %1283 = vmatprep.subr.bf16.mxu0 0
    %1284 = vmatpush1.bf16.msra.mxu0 0
    %1285 = vmatprep.mubr.bf16.mxu0 0
    %1286 = vmatmul.mubr.bf16.gmra.mrb[0].mxu0 %v1248
    %v1287 = vpop.f32.mrb[0].mxu0
    %v1288 = vadd.f32 0.0, %v1287
    %v1289 = vpop.f32.mrb[0].mxu0
    %v1290 = vpop.f32.mrb[0].mxu0
    %v1291 = vpop.f32.mrb[0].mxu0
    %1292 = vdwg.mxu0
    %1293 = vrot.lane.b32.xlu0 %v647, 104
    %v1294 = vpop.permute.xlu0 %1293
    %1295 = vrot.lane.b32.xlu0 %v648, 104
    %v1296 = vpop.permute.xlu0 %1295
    %v1298 = vsel %vm649, %v1294, 0
    %v1301 = vsel %vm649, %v1296, 0
    %1303 = vmatprep.subr.bf16.mxu0 0
    %1304 = vmatpush1.bf16.xpose.msra.mxu0 %v1301
    %1305 = vmatprep.subr.bf16.mxu0 0
    %1306 = vmatpush1.bf16.xpose.msra.mxu0 0
    %1307 = vmatprep.subr.bf16.mxu0 0
    %1308 = vmatpush1.bf16.xpose.msra.mxu0 0
    %1309 = vmatprep.subr.bf16.mxu0 0
    %1310 = vmatpush1.bf16.xpose.msra.mxu0 0
    %1311 = vmatprep.subr.bf16.mxu0 0
    %1312 = vmatpush1.bf16.xpose.msra.mxu0 0
    %1313 = vmatprep.subr.bf16.mxu0 0
    %1314 = vmatpush1.bf16.xpose.msra.mxu0 0
    %1315 = vmatprep.subr.bf16.mxu0 0
    %1316 = vmatpush1.bf16.xpose.msra.mxu0 0
    %1317 = vmatprep.subr.bf16.mxu0 0
    %1318 = vmatpush1.bf16.xpose.msra.mxu0 0
    %1319 = vmatprep.subr.bf16.mxu0 0
    %1320 = vmatpush1.bf16.xpose.msra.mxu0 0
    %1321 = vmatprep.subr.bf16.mxu0 0
    %1322 = vmatpush1.bf16.xpose.msra.mxu0 0
    %1323 = vmatprep.subr.bf16.mxu0 0
    %1324 = vmatpush1.bf16.xpose.msra.mxu0 0
    %1325 = vmatprep.subr.bf16.mxu0 0
    %1326 = vmatpush1.bf16.xpose.msra.mxu0 0
    %1327 = vmatprep.subr.bf16.mxu0 0
    %1328 = vmatpush1.bf16.xpose.msra.mxu0 0
    %1329 = vmatprep.subr.bf16.mxu0 0
    %1330 = vmatpush1.bf16.xpose.msra.mxu0 0
    %1331 = vmatprep.subr.bf16.mxu0 0
    %1332 = vmatpush1.bf16.xpose.msra.mxu0 0
    %1333 = vmatprep.subr.bf16.mxu0 0
    %1334 = vmatpush1.bf16.xpose.msra.mxu0 0
    %1335 = vmatprep.mubr.bf16.mxu0 0
    %1336 = vmatmul.mubr.bf16.gmra.mrb[0].mxu0 %v1298
    %v1337 = vpop.f32.mrb[0].mxu0
    %v1338 = vadd.f32 0.0, %v1337
    %v1339 = vpop.f32.mrb[0].mxu0
    %v1340 = vpop.f32.mrb[0].mxu0
    %v1341 = vadd.f32 0.0, %v1340
    %v1342 = vpop.f32.mrb[0].mxu0
    %1343 = vdwg.mxu0
    %1346 = vrot.lane.b32.xlu0 %v1338, 1
    %v1347 = vpop.permute.xlu0 %1346
    %1348 = vrot.lane.b32.xlu0 %v1341, 1
    %v1349 = vpop.permute.xlu0 %1348
    %v1352 = vsel %vm705, 0.0, %v1347
    %v1353 = vsel %vm705, 0.0, %v1349
    %v1356 = vrot.slane %v1352, 1
    %v1357 = vrot.slane %v1353, 1
    %v1358 = vsel %vm710, %v1356, %v1357
    %1359 = vrot.lane.b32.xlu0 %v1358, 9
    %v1360 = vpop.permute.xlu0 %1359
    %v1362 = vsel %vm717, %v1352, %v1360
    %1364 = vrot.lane.b32.xlu0 %v1362, 111
    %v1365 = vpop.permute.xlu0 %1364
    %1367 = vrot.lane.b32.xlu0 %v1362, 1
    %v1368 = vpop.permute.xlu0 %1367
    %v1370 = vsel %vm705, %v1365, %v1368
    %v1371 = vsel %vm728, %v1370, %v1362
    %1373 = vrot.lane.b32.xlu0 %v1371, 112
    %v1374 = vpop.permute.xlu0 %1373
    %1376 = vrot.lane.b32.xlu0 %v1371, 2
    %v1377 = vpop.permute.xlu0 %1376
    %v1379 = vsel %vm737, %v1374, %v1377
    %v1380 = vsel %vm741, %v1379, %v1371
    %1382 = vrot.lane.b32.xlu0 %v1380, 114
    %v1383 = vpop.permute.xlu0 %1382
    %1385 = vrot.lane.b32.xlu0 %v1380, 4
    %v1386 = vpop.permute.xlu0 %1385
    %v1388 = vsel %vm750, %v1383, %v1386
    %v1389 = vsel %vm754, %v1388, %v1380
    %1390 = vrot.lane.b32.xlu0 %v645, 104
    %v1391 = vpop.permute.xlu0 %1390
    %1392 = vrot.lane.b32.xlu0 %v646, 104
    %v1393 = vpop.permute.xlu0 %1392
    %1395 = vrot.lane.b32.xlu0 %v1389, 120
    %v1396 = vpop.permute.xlu0 %1395
    %v1399 = vsel %vm649, %v1391, 0
    %v1402 = vsel %vm649, %v1393, 0
    %1404 = vmatprep.subr.bf16.mxu0 0
    %1405 = vmatpush1.bf16.xpose.msra.mxu0 %v1402
    %1406 = vmatprep.subr.bf16.mxu0 0
    %1407 = vmatpush1.bf16.xpose.msra.mxu0 0
    %1408 = vmatprep.subr.bf16.mxu0 0
    %1409 = vmatpush1.bf16.xpose.msra.mxu0 0
    %1410 = vmatprep.subr.bf16.mxu0 0
    %1411 = vmatpush1.bf16.xpose.msra.mxu0 0
    %1412 = vmatprep.subr.bf16.mxu0 0
    %1413 = vmatpush1.bf16.xpose.msra.mxu0 0
    %1414 = vmatprep.subr.bf16.mxu0 0
    %1415 = vmatpush1.bf16.xpose.msra.mxu0 0
    %1416 = vmatprep.subr.bf16.mxu0 0
    %1417 = vmatpush1.bf16.xpose.msra.mxu0 0
    %1418 = vmatprep.subr.bf16.mxu0 0
    %1419 = vmatpush1.bf16.xpose.msra.mxu0 0
    %1420 = vmatprep.subr.bf16.mxu0 0
    %1421 = vmatpush1.bf16.xpose.msra.mxu0 0
    %1422 = vmatprep.subr.bf16.mxu0 0
    %1423 = vmatpush1.bf16.xpose.msra.mxu0 0
    %1424 = vmatprep.subr.bf16.mxu0 0
    %1425 = vmatpush1.bf16.xpose.msra.mxu0 0
    %1426 = vmatprep.subr.bf16.mxu0 0
    %1427 = vmatpush1.bf16.xpose.msra.mxu0 0
    %1428 = vmatprep.subr.bf16.mxu0 0
    %1429 = vmatpush1.bf16.xpose.msra.mxu0 0
    %1430 = vmatprep.subr.bf16.mxu0 0
    %1431 = vmatpush1.bf16.xpose.msra.mxu0 0
    %1432 = vmatprep.subr.bf16.mxu0 0
    %1433 = vmatpush1.bf16.xpose.msra.mxu0 0
    %1434 = vmatprep.subr.bf16.mxu0 0
    %1435 = vmatpush1.bf16.xpose.msra.mxu0 0
    %1436 = vmatprep.mubr.bf16.mxu0 0
    %1437 = vmatmul.mubr.bf16.gmra.mrb[0].mxu0 %v1399
    %v1438 = vpop.f32.mrb[0].mxu0
    %v1439 = vadd.f32 %v1396, %v1438
    %v1440 = vpop.f32.mrb[0].mxu0
    %v1441 = vpop.f32.mrb[0].mxu0
    %v1442 = vpop.f32.mrb[0].mxu0
    %1443 = vdwg.mxu0
    %v1444 = vsel %vm649, %v1439, -inf
    %1445 = vmax.xlane.f32.xlu0 %v1444
    %v1446 = vpop.xlane.xlu0 %1445
    %v1447 = vsub.f32 %v1439, %v1446
    %v1448 = vmul.f32 %v1447, 1.442695
    %v1449 = vpow.pop %v1448
    %v1450 = vsel %vm649, %v1449, 0.0
    %1451 = vadd.xlane.f32.xlu0 %v1450
    %v1452 = vpop.xlane.xlu0 %1451
    %v1453 = vrcp.pop %v1452
    %v1454 = vmul.f32 %v1449, %v1453
    %v1455 = vpack.c.bf16 %v1454, %v1454
    %1456 = vrot.lane.b32.xlu0 %v818, 104
    %v1457 = vpop.permute.xlu0 %1456
    %v1459 = vsel %vm649, %v1455, 0
    %v1462 = vsel %vm822, %v1457, 0
    %1464 = vmatprep.subr.bf16.mxu0 0
    %1465 = vmatpush1.bf16.msra.mxu0 %v1462
    %1466 = vmatprep.subr.bf16.mxu0 0
    %1467 = vmatpush1.bf16.msra.mxu0 0
    %1468 = vmatprep.subr.bf16.mxu0 0
    %1469 = vmatpush1.bf16.msra.mxu0 0
    %1470 = vmatprep.subr.bf16.mxu0 0
    %1471 = vmatpush1.bf16.msra.mxu0 0
    %1472 = vmatprep.subr.bf16.mxu0 0
    %1473 = vmatpush1.bf16.msra.mxu0 0
    %1474 = vmatprep.subr.bf16.mxu0 0
    %1475 = vmatpush1.bf16.msra.mxu0 0
    %1476 = vmatprep.subr.bf16.mxu0 0
    %1477 = vmatpush1.bf16.msra.mxu0 0
    %1478 = vmatprep.subr.bf16.mxu0 0
    %1479 = vmatpush1.bf16.msra.mxu0 0
    %1480 = vmatprep.subr.bf16.mxu0 0
    %1481 = vmatpush1.bf16.msra.mxu0 0
    %1482 = vmatprep.subr.bf16.mxu0 0
    %1483 = vmatpush1.bf16.msra.mxu0 0
    %1484 = vmatprep.subr.bf16.mxu0 0
    %1485 = vmatpush1.bf16.msra.mxu0 0
    %1486 = vmatprep.subr.bf16.mxu0 0
    %1487 = vmatpush1.bf16.msra.mxu0 0
    %1488 = vmatprep.subr.bf16.mxu0 0
    %1489 = vmatpush1.bf16.msra.mxu0 0
    %1490 = vmatprep.subr.bf16.mxu0 0
    %1491 = vmatpush1.bf16.msra.mxu0 0
    %1492 = vmatprep.subr.bf16.mxu0 0
    %1493 = vmatpush1.bf16.msra.mxu0 0
    %1494 = vmatprep.subr.bf16.mxu0 0
    %1495 = vmatpush1.bf16.msra.mxu0 0
    %1496 = vmatprep.mubr.bf16.mxu0 0
    %1497 = vmatmul.mubr.bf16.gmra.mrb[0].mxu0 %v1459
    %v1498 = vpop.f32.mrb[0].mxu0
    %v1499 = vadd.f32 0.0, %v1498
    %v1500 = vpop.f32.mrb[0].mxu0
    %v1501 = vpop.f32.mrb[0].mxu0
    %v1502 = vpop.f32.mrb[0].mxu0
    %1503 = vdwg.mxu0
    %1505 = vrot.lane.b32.xlu0 %v1077, 8
    %v1506 = vpop.permute.xlu0 %1505
    %1509 = vrot.lane.b32.xlu0 %v1288, 16
    %v1510 = vpop.permute.xlu0 %1509
    %1513 = vrot.lane.b32.xlu0 %v1499, 24
    %v1514 = vpop.permute.xlu0 %1513
    %v1516 = vsel %vm649, %v861, %v1506
    %vm1517 = vcmask 130048
    %v1518 = vsel %vm1517, %v1516, %v1510
    %vm1519 = vcmask 195584
    %v1520 = vsel %vm1519, %v1518, %v1514
    %v1521 = vpack.c.bf16 %v1520, %v1520
    %v1522 = vld [vmem:[#allocation16] sm:$0xff]
    %v1523 = vld [vmem:[#allocation16 + $0x8] sm:$0xff]
    %v1524 = vld [vmem:[#allocation16 + $0x10] sm:$0xff]
    %v1525 = vld [vmem:[#allocation16 + $0x18] sm:$0xff]
    %v1526 = vpack.c.bf16 %v1523, %v1522
    %v1527 = vpack.c.bf16 %v1525, %v1524
    %v1529 = vsel %vm269, %v1521, 0
    %1531 = vmatprep.subr.bf16.mxu0 0
    %1532 = vmatpush1.bf16.msra.mxu0 %v1526
    %1533 = vmatprep.subr.bf16.mxu0 0
    %1534 = vmatpush1.bf16.msra.mxu0 %v1527
    %1535 = vmatprep.subr.bf16.mxu0 0
    %1536 = vmatpush1.bf16.msra.mxu0 0
    %1537 = vmatprep.subr.bf16.mxu0 0
    %1538 = vmatpush1.bf16.msra.mxu0 0
    %1539 = vmatprep.subr.bf16.mxu0 0
    %1540 = vmatpush1.bf16.msra.mxu0 0
    %1541 = vmatprep.subr.bf16.mxu0 0
    %1542 = vmatpush1.bf16.msra.mxu0 0
    %1543 = vmatprep.subr.bf16.mxu0 0
    %1544 = vmatpush1.bf16.msra.mxu0 0
    %1545 = vmatprep.subr.bf16.mxu0 0
    %1546 = vmatpush1.bf16.msra.mxu0 0
    %1547 = vmatprep.subr.bf16.mxu0 0
    %1548 = vmatpush1.bf16.msra.mxu0 0
    %1549 = vmatprep.subr.bf16.mxu0 0
    %1550 = vmatpush1.bf16.msra.mxu0 0
    %1551 = vmatprep.subr.bf16.mxu0 0
    %1552 = vmatpush1.bf16.msra.mxu0 0
    %1553 = vmatprep.subr.bf16.mxu0 0
    %1554 = vmatpush1.bf16.msra.mxu0 0
    %1555 = vmatprep.subr.bf16.mxu0 0
    %1556 = vmatpush1.bf16.msra.mxu0 0
    %1557 = vmatprep.subr.bf16.mxu0 0
    %1558 = vmatpush1.bf16.msra.mxu0 0
    %1559 = vmatprep.subr.bf16.mxu0 0
    %1560 = vmatpush1.bf16.msra.mxu0 0
    %1561 = vmatprep.subr.bf16.mxu0 0
    %1562 = vmatpush1.bf16.msra.mxu0 0
    %1563 = vmatprep.mubr.bf16.mxu0 0
    %1564 = vmatmul.mubr.bf16.gmra.mrb[0].mxu0 %v1529
    %v1565 = vpop.f32.mrb[0].mxu0
    %v1566 = vadd.f32 %v268, %v1565
    %v1567 = vpop.f32.mrb[0].mxu0
    %v1568 = vpop.f32.mrb[0].mxu0
    %v1569 = vpop.f32.mrb[0].mxu0
    %1570 = vdwg.mxu0
    %1571 = vst.msk [vmem:[#allocation29] sm:$0xff] %vm269, %v1566
    // Predicated region
    $region138: #{tpu_custom_call.1} parent=1 // pred_check
      _
    $region139: #{tpu_custom_call.1} parent=1 // pred_check_branch
      %1573 = sbr.rel (0) target = $region141
    $region140: #{tpu_custom_call.1} parent=1 // pred_region
      %s1575 = ssub.s32 128, 128
      %1576 = vsyncadd [#allocation4], %s1575
      %s1578 = sshll.u32 [#allocation29], 4
      %s1579 = int_to_ptr.vmem [resolvable:$true] %s1578
      %1581 = dma.vmem_to_hbm [thread:$0]  %s1579, 128, %s17, [#allocation4]
    $region141: #{tpu_custom_call.1} parent=1 // pred_fallthru
      _
    // Predicated region
    $region142: #{tpu_custom_call.1} parent=1 // pred_check
      _
    $region143: #{tpu_custom_call.1} parent=1 // pred_check_branch
      %1583 = sbr.rel (0) target = $region145
    $region144: #{tpu_custom_call.1} parent=1 // pred_region
      %1584 = dma.done [#allocation4], 128
    $region145: #{tpu_custom_call.1} parent=1 // pred_fallthru
      _
    %1585 = vsyncpa [#allocation3], 1
    %1586 = vsyncpa [#allocation6], 1
    %1587 = vsyncpa [#allocation9], 1
    %1588 = vsyncpa [#allocation12], 1
    %1589 = vsyncpa [#allocation15], 1
    %1590 = vsyncpa [#allocation18], 1
    %1591 = vsyncpa [#allocation21], 1
    %1592 = vsyncpa [#allocation24], 1
    %1593 = vsyncpa [#allocation27], 1
    %1594 = vsyncpa [#allocation4], 1

</llo_original>
